<compile_context>
chip_gen: v7x
topology: tpu7x:2x2x1
jax: 0.10.0
libtpu: 0.0.40
codegen_flags: <defaults>
</compile_context>

<pallas_src>
import functools

import jax
import jax.numpy as jnp
from jax.experimental import pallas as pl
from jax.experimental.pallas import tpu as pltpu


def _round_up(x, m):
    return ((x + m - 1) // m) * m


def _pick_tm(m128, tm_max=8192):
    """Pick the lane-tile size: trade tile-padding waste against the ~0.35us
    fixed per-grid-step overhead (expressed as a bandwidth-equivalent number of
    128-lane columns), then prefer >=2 tiles so v7x's two TensorCores both get
    work.  Everything here is Python-time (static)."""
    cap = max(128, (min(tm_max, m128) // 128) * 128)
    best_tm, best_cost = 128, None
    for tm in range(128, cap + 1, 128):
        m_pad = _round_up(m128, tm)
        cost = m_pad + 4096 * (m_pad // tm)   # padded lanes + per-step overhead proxy
        if best_cost is None or cost < best_cost:
            best_tm, best_cost = tm, cost
    if m128 // best_tm == 1 and m128 >= 512:
        best_tm = _round_up(m128 // 2, 128)   # ensure >=2 parallel tiles
    return best_tm


# ---------------------------------------------------------------------------
# Pallas kernel: halo'd manual input DMA + kh*kw shifted MXU matmuls + bias,
# split at a sublane-aligned boundary, softplus on the sigma half.
# ---------------------------------------------------------------------------
def _vae2d_conv_kernel(x_hbm, w_ref, b_ref, mu_ref, sd_ref, xbuf, sem, *,
                       tm, wp, kh, kw, c_pad):
    # x_hbm : [C_in_pad, M_pad + halo_pad]   bf16 flat padded input (HBM / ANY)
    # w_ref : [kh*kw, 2*c_pad, C_in_pad]     bf16 fused per-tap weights (resident)
    # b_ref : [2*c_pad, 1]                   f32 fused bias (resident)
    # mu_ref, sd_ref : [c_pad, tm]           f32 lane-dense outputs
    # xbuf  : VMEM [C_in_pad, tm + halo_pad] bf16 scratch
    t = pl.program_id(0)
    start = pl.multiple_of(t * tm, 128)

    cp = pltpu.make_async_copy(
        x_hbm.at[:, pl.ds(start, xbuf.shape[1])], xbuf, sem)
    cp.start()
    cp.wait()

    # Dense (stride-1) conv at every flat position m of this tile:
    #   out[:, m] = sum_{ki,kj} W[ki,kj] @ x_flat[:, m + ki*Wp + kj]
    acc = None
    for ki in range(kh):
        for kj in range(kw):
            off = ki * wp + kj                     # static lane offset into the halo
            xs = xbuf[:, off:off + tm]             # [C_in_pad, tm] bf16
            d = jnp.dot(w_ref[ki * kw + kj], xs,
                        preferred_element_type=jnp.float32)   # [2*c_pad, tm] f32
            acc = d if acc is None else acc + d
    acc = acc + b_ref[...]                          # broadcast bias over lanes

    mu = acc[:c_pad, :]
    sg = acc[c_pad:, :]
    mu_ref[...] = mu.astype(mu_ref.dtype)
    # Numerically stable softplus(x) = log(1 + exp(x))  (torch.nn.Softplus, beta=1).
    sd_ref[...] = (jnp.maximum(sg, 0.0)
                   + jnp.log1p(jnp.exp(-jnp.abs(sg)))).astype(sd_ref.dtype)


# ---------------------------------------------------------------------------
# Host-side wrapper: flatten/pad input, launch the 1-D parallel grid.
# ---------------------------------------------------------------------------
def _vae2d_fused_conv(x, w_cat, b_cat, kh, kw, padding, *, tm_max=8192):
    """Dense (stride-1) fused mu/sigma conv over the zero-padded input.

    Returns (mu_dense, sd_dense), each [c_pad, B, Hp, Wp] f32, where entry
    (c, b, y, x) is the conv anchored at padded position (y, x).  Entries with
    y > Hp-kh or x > Wp-kw are garbage and must be sliced off by the caller."""
    B, C_in, H, W = x.shape
    n_taps, two_cp, c_in_pad = w_cat.shape
    c_pad = two_cp // 2
    Hp, Wp = H + 2 * padding, W + 2 * padding

    # Spatial zero-pad + channel pad to 8 sublanes, bf16, flatten (b,y,x) -> lanes.
    xp = jnp.pad(x, ((0, 0), (0, c_in_pad - C_in),
                     (padding, padding), (padding, padding))).astype(jnp.bfloat16)
    x_flat = jnp.transpose(xp, (1, 0, 2, 3)).reshape(c_in_pad, B * Hp * Wp)

    M = B * Hp * Wp
    m128 = _round_up(M, 128)
    tm = _pick_tm(m128, tm_max)
    m_pad = _round_up(m128, tm)
    nt = m_pad // tm
    halo = (kh - 1) * Wp + (kw - 1)
    halo_pad = _round_up(halo, 128)

    # Pad the flat axis so every tile's [tm + halo_pad] DMA window is in bounds.
    x_flat = jnp.pad(x_flat, ((0, 0), (0, m_pad + halo_pad - M)))

    out_sd = jax.ShapeDtypeStruct((c_pad, m_pad), jnp.float32)
    kernel = functools.partial(_vae2d_conv_kernel,
                               tm=tm, wp=Wp, kh=kh, kw=kw, c_pad=c_pad)

    cost = pl.CostEstimate(
        flops=2 * two_cp * c_in_pad * n_taps * m_pad,
        transcendentals=2 * c_pad * m_pad,                 # exp + log1p on sigma half
        bytes_accessed=int(x_flat.size) * 2 + int(w_cat.size) * 2
                       + int(b_cat.size) * 4 + 2 * c_pad * m_pad * 4,
    )

    mu_full, sd_full = pl.pallas_call(
        kernel,
        out_shape=(out_sd, out_sd),
        grid_spec=pltpu.PrefetchScalarGridSpec(
            num_scalar_prefetch=0,
            grid=(nt,),
            in_specs=[
                pl.BlockSpec(memory_space=pl.ANY),                       # flat input (manual halo DMA)
                pl.BlockSpec((n_taps, two_cp, c_in_pad), lambda t: (0, 0, 0)),  # weights (resident)
                pl.BlockSpec((two_cp, 1), lambda t: (0, 0)),             # bias (resident)
            ],
            out_specs=[
                pl.BlockSpec((c_pad, tm), lambda t: (0, t)),             # mu
                pl.BlockSpec((c_pad, tm), lambda t: (0, t)),             # sd
            ],
            scratch_shapes=[
                pltpu.VMEM((c_in_pad, tm + halo_pad), jnp.bfloat16),     # halo'd input tile
                pltpu.SemaphoreType.DMA,
            ],
        ),
        compiler_params=pltpu.CompilerParams(
            dimension_semantics=("parallel",),
            vmem_limit_bytes=32 * 1024 * 1024,    # safe on v5e/v6e and v7x (64 MiB phys)
        ),
        cost_estimate=cost,
    )(x_flat, w_cat, b_cat)

    mu_dense = mu_full[:, :M].reshape(c_pad, B, Hp, Wp)
    sd_dense = sd_full[:, :M].reshape(c_pad, B, Hp, Wp)
    return mu_dense, sd_dense


# ---------------------------------------------------------------------------
# Module-equivalent wrapper.
# ---------------------------------------------------------------------------
class GaussianVAE2DFullPallas:
    def __init__(self, n_in, n_out, kernel_size, stride, padding=0, *,
                 key=None, tm_max=8192):
        if key is None:
            key = jax.random.PRNGKey(0)
        self.n_in, self.n_out = n_in, n_out
        self.kh = self.kw = kernel_size
        self.stride, self.padding = stride, padding
        self.tm_max = tm_max

        k1, k2, k3, k4 = jax.random.split(key, 4)
        std = 0.002                                   # reset_parameters(): N(0, 0.002)
        w_shape = (n_out, n_in, self.kh, self.kw)     # PyTorch Conv2d OIHW layout
        self.w_mu = jax.random.normal(k1, w_shape, jnp.float32) * std
        self.b_mu = jax.random.normal(k2, (n_out,), jnp.float32) * std
        self.w_sg = jax.random.normal(k3, w_shape, jnp.float32) * std
        self.b_sg = jax.random.normal(k4, (n_out,), jnp.float32) * std

        # Fused per-tap weights [kh*kw, 2*c_pad, c_in_pad] (bf16) + fused bias
        # [2*c_pad, 1] (f32).  Rows [0, n_out) are mu, [c_pad, c_pad+n_out) sigma.
        self.c_pad = _round_up(n_out, 8)
        self.c_in_pad = _round_up(n_in, 8)
        n_taps = self.kh * self.kw
        w_mu_t = jnp.transpose(self.w_mu, (2, 3, 0, 1)).reshape(n_taps, n_out, n_in)
        w_sg_t = jnp.transpose(self.w_sg, (2, 3, 0, 1)).reshape(n_taps, n_out, n_in)
        w_cat = jnp.zeros((n_taps, 2 * self.c_pad, self.c_in_pad), jnp.float32)
        w_cat = w_cat.at[:, :n_out, :n_in].set(w_mu_t)
        w_cat = w_cat.at[:, self.c_pad:self.c_pad + n_out, :n_in].set(w_sg_t)
        self.w_cat = w_cat.astype(jnp.bfloat16)
        b_cat = jnp.zeros((2 * self.c_pad, 1), jnp.float32)
        b_cat = b_cat.at[:n_out, 0].set(self.b_mu)
        b_cat = b_cat.at[self.c_pad:self.c_pad + n_out, 0].set(self.b_sg)
        self.b_cat = b_cat

    def __call__(self, x):
        """x: NCHW [B, C_in, H, W] -> (mu, sd), each [B, C_out, Ho, Wo]."""
        B, _, H, W = x.shape
        kh, kw, s, p = self.kh, self.kw, self.stride, self.padding
        Ho = (H + 2 * p - kh) // s + 1
        Wo = (W + 2 * p - kw) // s + 1
        mu_d, sd_d = _vae2d_fused_conv(x, self.w_cat, self.b_cat, kh, kw, p,
                                       tm_max=self.tm_max)
        # TODO(synk): stride > 1 is handled by computing the dense stride-1 output
        # and subsampling here (s^2 extra work); a stride-aware in-kernel gather
        # would remove that waste.
        ys = slice(0, (Ho - 1) * s + 1, s)
        xs = slice(0, (Wo - 1) * s + 1, s)
        mu = jnp.transpose(mu_d[:self.n_out, :, ys, xs], (1, 0, 2, 3))
        sd = jnp.transpose(sd_d[:self.n_out, :, ys, xs], (1, 0, 2, 3))
        return mu, sd


# ---------------------------------------------------------------------------
# Plain-JAX reference for correctness checks.
# ---------------------------------------------------------------------------
def _ref_forward(mod, x, *, bf16_data=False):
    """With bf16_data=True the inputs/weights are quantized to bf16 exactly as
    the kernel's data movement does (accumulation stays f32), so it should
    match the kernel to ~1e-6.  With bf16_data=False it is the pure-f32 module."""
    w_mu, w_sg, xr = mod.w_mu, mod.w_sg, x
    if bf16_data:
        q = lambda a: a.astype(jnp.bfloat16).astype(jnp.float32)
        w_mu, w_sg, xr = q(w_mu), q(w_sg), q(xr)
    dn = jax.lax.conv_dimension_numbers(x.shape, w_mu.shape, ("NCHW", "OIHW", "NCHW"))
    pad = [(mod.padding, mod.padding)] * 2

    def conv(inp, w):
        return jax.lax.conv_general_dilated(
            inp, w, window_strides=(mod.stride, mod.stride), padding=pad,
            dimension_numbers=dn, precision=jax.lax.Precision.HIGHEST)

    mu = conv(xr, w_mu) + mod.b_mu[None, :, None, None]
    sg = conv(xr, w_sg) + mod.b_sg[None, :, None, None]
    return mu, jax.nn.softplus(sg)


if __name__ == "__main__":
    # Small shapes consistent with the module's forward.
    B, C_in, H, W = 2, 4, 16, 16
    C_out, ksize, stride, padding = 8, 3, 1, 1

    key = jax.random.PRNGKey(0)
    k_x, k_p = jax.random.split(key)
    x = jax.random.normal(k_x, (B, C_in, H, W), jnp.float32)

    mod = GaussianVAE2DFullPallas(C_in, C_out, ksize, stride, padding, key=k_p)

    mu, sd = mod(x)
    mu = jax.block_until_ready(mu)
    sd = jax.block_until_ready(sd)
    assert mu.shape == (B, C_out, H, W) and sd.shape == (B, C_out, H, W)

    # Exact-math check: reference using the same bf16-quantized data, f32 accum.
    mu_q, sd_q = _ref_forward(mod, x, bf16_data=True)
    assert jnp.allclose(mu, mu_q, atol=1e-5, rtol=1e-5), \
        float(jnp.max(jnp.abs(mu - mu_q)))
    assert jnp.allclose(sd, sd_q, atol=1e-5, rtol=1e-5), \
        float(jnp.max(jnp.abs(sd - sd_q)))

    # Semantics check vs. the pure-f32 module (bf16 data-movement quantization bound).
    mu_f, sd_f = _ref_forward(mod, x, bf16_data=False)
    assert jnp.allclose(mu, mu_f, atol=5e-3), float(jnp.max(jnp.abs(mu - mu_f)))
    assert jnp.allclose(sd, sd_f, atol=5e-3), float(jnp.max(jnp.abs(sd - sd_f)))

    print("KERNEL_OK")
</pallas_src>

<mosaic_0001>
module attributes {stable_mosaic.version = 11 : i64} {
  func.func @_vae2d_conv_kernel(%arg0: i32, %arg1: memref<8x896xbf16, #tpu.memory_space<any>>, %arg2: memref<9x16x8xbf16, #tpu.memory_space<vmem>>, %arg3: memref<16x1xf32, #tpu.memory_space<vmem>>, %arg4: memref<8x384xf32, #tpu.memory_space<vmem>>, %arg5: memref<8x384xf32, #tpu.memory_space<vmem>>, %arg6: memref<8x512xbf16, #tpu.memory_space<vmem>>, %arg7: memref<!tpu.dma_semaphore, #tpu.memory_space<semaphore_mem>>) attributes {dimension_semantics = [#tpu.dimension_semantics<parallel>], iteration_bounds = array<i64: 2>, scalar_prefetch = 0 : i64, scratch_operands = 2 : i64, tpu.core_type = #tpu.core_type<tc>, window_params = [{}, {pipeline_mode = #tpu.pipeline_mode<synchronous>, transform_indices = @transform_1, window_bounds = array<i64: 9, 16, 8>}, {pipeline_mode = #tpu.pipeline_mode<synchronous>, transform_indices = @transform_2, window_bounds = array<i64: 16, 1>}, {transform_indices = @transform_3, window_bounds = array<i64: 8, 384>}, {transform_indices = @transform_4, window_bounds = array<i64: 8, 384>}]} {
    %c384_i32 = arith.constant 384 : i32
    %0 = arith.muli %arg0, %c384_i32 : i32
    %1 = tpu.assume_multiple %0, 128 : i32
    %c0_i32 = arith.constant 0 : i32
    %2 = tpu.memref_slice %arg1[%c0_i32, %1] : memref<8x896xbf16, #tpu.memory_space<any>> -> memref<8x512xbf16, #tpu.memory_space<any>>
    tpu.enqueue_dma source(%2 : memref<8x512xbf16, #tpu.memory_space<any>>) target(%arg6 : memref<8x512xbf16, #tpu.memory_space<vmem>>) target_semaphore(%arg7 : memref<!tpu.dma_semaphore, #tpu.memory_space<semaphore_mem>>)
    %c0_i32_0 = arith.constant 0 : i32
    %3 = tpu.memref_slice %arg1[%c0_i32_0, %1] : memref<8x896xbf16, #tpu.memory_space<any>> -> memref<8x512xbf16, #tpu.memory_space<any>>
    tpu.wait_dma2 semaphore(%arg7 : memref<!tpu.dma_semaphore, #tpu.memory_space<semaphore_mem>>) src(%3 : memref<8x512xbf16, #tpu.memory_space<any>>) dst(%arg6 : memref<8x512xbf16, #tpu.memory_space<vmem>>)
    %c0 = arith.constant 0 : index
    %c0_1 = arith.constant 0 : index
    %4 = vector.load %arg6[%c0, %c0_1] : memref<8x512xbf16, #tpu.memory_space<vmem>>, vector<8x384xbf16>
    %c0_2 = arith.constant 0 : index
    %c0_3 = arith.constant 0 : index
    %c0_4 = arith.constant 0 : index
    %5 = vector.load %arg2[%c0_2, %c0_3, %c0_4] : memref<9x16x8xbf16, #tpu.memory_space<vmem>>, vector<1x16x8xbf16>
    %6 = vector.shape_cast %5 : vector<1x16x8xbf16> to vector<16x8xbf16>
    %cst = arith.constant dense<0.000000e+00> : vector<16x384xf32>
    %7 = tpu.matmul %6, %4, %cst {dimension_numbers = #tpu.dot_dimension_numbers<[1], [0], [0], [1], [0, 0, 1, 1], [], []>} : vector<16x8xbf16>, vector<8x384xbf16>, vector<16x384xf32> -> vector<16x384xf32>
    %c0_5 = arith.constant 0 : index
    %c1 = arith.constant 1 : index
    %8 = vector.load %arg6[%c0_5, %c1] : memref<8x512xbf16, #tpu.memory_space<vmem>>, vector<8x384xbf16>
    %c1_6 = arith.constant 1 : index
    %c0_7 = arith.constant 0 : index
    %c0_8 = arith.constant 0 : index
    %9 = vector.load %arg2[%c1_6, %c0_7, %c0_8] : memref<9x16x8xbf16, #tpu.memory_space<vmem>>, vector<1x16x8xbf16>
    %10 = vector.shape_cast %9 : vector<1x16x8xbf16> to vector<16x8xbf16>
    %cst_9 = arith.constant dense<0.000000e+00> : vector<16x384xf32>
    %11 = tpu.matmul %10, %8, %cst_9 {dimension_numbers = #tpu.dot_dimension_numbers<[1], [0], [0], [1], [0, 0, 1, 1], [], []>} : vector<16x8xbf16>, vector<8x384xbf16>, vector<16x384xf32> -> vector<16x384xf32>
    %12 = arith.addf %7, %11 : vector<16x384xf32>
    %c0_10 = arith.constant 0 : index
    %c2 = arith.constant 2 : index
    %13 = vector.load %arg6[%c0_10, %c2] : memref<8x512xbf16, #tpu.memory_space<vmem>>, vector<8x384xbf16>
    %c2_11 = arith.constant 2 : index
    %c0_12 = arith.constant 0 : index
    %c0_13 = arith.constant 0 : index
    %14 = vector.load %arg2[%c2_11, %c0_12, %c0_13] : memref<9x16x8xbf16, #tpu.memory_space<vmem>>, vector<1x16x8xbf16>
    %15 = vector.shape_cast %14 : vector<1x16x8xbf16> to vector<16x8xbf16>
    %cst_14 = arith.constant dense<0.000000e+00> : vector<16x384xf32>
    %16 = tpu.matmul %15, %13, %cst_14 {dimension_numbers = #tpu.dot_dimension_numbers<[1], [0], [0], [1], [0, 0, 1, 1], [], []>} : vector<16x8xbf16>, vector<8x384xbf16>, vector<16x384xf32> -> vector<16x384xf32>
    %17 = arith.addf %12, %16 : vector<16x384xf32>
    %c0_15 = arith.constant 0 : index
    %c18 = arith.constant 18 : index
    %18 = vector.load %arg6[%c0_15, %c18] : memref<8x512xbf16, #tpu.memory_space<vmem>>, vector<8x384xbf16>
    %c3 = arith.constant 3 : index
    %c0_16 = arith.constant 0 : index
    %c0_17 = arith.constant 0 : index
    %19 = vector.load %arg2[%c3, %c0_16, %c0_17] : memref<9x16x8xbf16, #tpu.memory_space<vmem>>, vector<1x16x8xbf16>
    %20 = vector.shape_cast %19 : vector<1x16x8xbf16> to vector<16x8xbf16>
    %cst_18 = arith.constant dense<0.000000e+00> : vector<16x384xf32>
    %21 = tpu.matmul %20, %18, %cst_18 {dimension_numbers = #tpu.dot_dimension_numbers<[1], [0], [0], [1], [0, 0, 1, 1], [], []>} : vector<16x8xbf16>, vector<8x384xbf16>, vector<16x384xf32> -> vector<16x384xf32>
    %22 = arith.addf %17, %21 : vector<16x384xf32>
    %c0_19 = arith.constant 0 : index
    %c19 = arith.constant 19 : index
    %23 = vector.load %arg6[%c0_19, %c19] : memref<8x512xbf16, #tpu.memory_space<vmem>>, vector<8x384xbf16>
    %c4 = arith.constant 4 : index
    %c0_20 = arith.constant 0 : index
    %c0_21 = arith.constant 0 : index
    %24 = vector.load %arg2[%c4, %c0_20, %c0_21] : memref<9x16x8xbf16, #tpu.memory_space<vmem>>, vector<1x16x8xbf16>
    %25 = vector.shape_cast %24 : vector<1x16x8xbf16> to vector<16x8xbf16>
    %cst_22 = arith.constant dense<0.000000e+00> : vector<16x384xf32>
    %26 = tpu.matmul %25, %23, %cst_22 {dimension_numbers = #tpu.dot_dimension_numbers<[1], [0], [0], [1], [0, 0, 1, 1], [], []>} : vector<16x8xbf16>, vector<8x384xbf16>, vector<16x384xf32> -> vector<16x384xf32>
    %27 = arith.addf %22, %26 : vector<16x384xf32>
    %c0_23 = arith.constant 0 : index
    %c20 = arith.constant 20 : index
    %28 = vector.load %arg6[%c0_23, %c20] : memref<8x512xbf16, #tpu.memory_space<vmem>>, vector<8x384xbf16>
    %c5 = arith.constant 5 : index
    %c0_24 = arith.constant 0 : index
    %c0_25 = arith.constant 0 : index
    %29 = vector.load %arg2[%c5, %c0_24, %c0_25] : memref<9x16x8xbf16, #tpu.memory_space<vmem>>, vector<1x16x8xbf16>
    %30 = vector.shape_cast %29 : vector<1x16x8xbf16> to vector<16x8xbf16>
    %cst_26 = arith.constant dense<0.000000e+00> : vector<16x384xf32>
    %31 = tpu.matmul %30, %28, %cst_26 {dimension_numbers = #tpu.dot_dimension_numbers<[1], [0], [0], [1], [0, 0, 1, 1], [], []>} : vector<16x8xbf16>, vector<8x384xbf16>, vector<16x384xf32> -> vector<16x384xf32>
    %32 = arith.addf %27, %31 : vector<16x384xf32>
    %c0_27 = arith.constant 0 : index
    %c36 = arith.constant 36 : index
    %33 = vector.load %arg6[%c0_27, %c36] : memref<8x512xbf16, #tpu.memory_space<vmem>>, vector<8x384xbf16>
    %c6 = arith.constant 6 : index
    %c0_28 = arith.constant 0 : index
    %c0_29 = arith.constant 0 : index
    %34 = vector.load %arg2[%c6, %c0_28, %c0_29] : memref<9x16x8xbf16, #tpu.memory_space<vmem>>, vector<1x16x8xbf16>
    %35 = vector.shape_cast %34 : vector<1x16x8xbf16> to vector<16x8xbf16>
    %cst_30 = arith.constant dense<0.000000e+00> : vector<16x384xf32>
    %36 = tpu.matmul %35, %33, %cst_30 {dimension_numbers = #tpu.dot_dimension_numbers<[1], [0], [0], [1], [0, 0, 1, 1], [], []>} : vector<16x8xbf16>, vector<8x384xbf16>, vector<16x384xf32> -> vector<16x384xf32>
    %37 = arith.addf %32, %36 : vector<16x384xf32>
    %c0_31 = arith.constant 0 : index
    %c37 = arith.constant 37 : index
    %38 = vector.load %arg6[%c0_31, %c37] : memref<8x512xbf16, #tpu.memory_space<vmem>>, vector<8x384xbf16>
    %c7 = arith.constant 7 : index
    %c0_32 = arith.constant 0 : index
    %c0_33 = arith.constant 0 : index
    %39 = vector.load %arg2[%c7, %c0_32, %c0_33] : memref<9x16x8xbf16, #tpu.memory_space<vmem>>, vector<1x16x8xbf16>
    %40 = vector.shape_cast %39 : vector<1x16x8xbf16> to vector<16x8xbf16>
    %cst_34 = arith.constant dense<0.000000e+00> : vector<16x384xf32>
    %41 = tpu.matmul %40, %38, %cst_34 {dimension_numbers = #tpu.dot_dimension_numbers<[1], [0], [0], [1], [0, 0, 1, 1], [], []>} : vector<16x8xbf16>, vector<8x384xbf16>, vector<16x384xf32> -> vector<16x384xf32>
    %42 = arith.addf %37, %41 : vector<16x384xf32>
    %c0_35 = arith.constant 0 : index
    %c38 = arith.constant 38 : index
    %43 = vector.load %arg6[%c0_35, %c38] : memref<8x512xbf16, #tpu.memory_space<vmem>>, vector<8x384xbf16>
    %c8 = arith.constant 8 : index
    %c0_36 = arith.constant 0 : index
    %c0_37 = arith.constant 0 : index
    %44 = vector.load %arg2[%c8, %c0_36, %c0_37] : memref<9x16x8xbf16, #tpu.memory_space<vmem>>, vector<1x16x8xbf16>
    %45 = vector.shape_cast %44 : vector<1x16x8xbf16> to vector<16x8xbf16>
    %cst_38 = arith.constant dense<0.000000e+00> : vector<16x384xf32>
    %46 = tpu.matmul %45, %43, %cst_38 {dimension_numbers = #tpu.dot_dimension_numbers<[1], [0], [0], [1], [0, 0, 1, 1], [], []>} : vector<16x8xbf16>, vector<8x384xbf16>, vector<16x384xf32> -> vector<16x384xf32>
    %47 = arith.addf %42, %46 : vector<16x384xf32>
    %c0_39 = arith.constant 0 : index
    %c0_40 = arith.constant 0 : index
    %48 = vector.load %arg3[%c0_39, %c0_40] : memref<16x1xf32, #tpu.memory_space<vmem>>, vector<16x1xf32>
    %49 = vector.broadcast %48 : vector<16x1xf32> to vector<16x384xf32>
    %50 = arith.addf %47, %49 : vector<16x384xf32>
    %51 = vector.extract_strided_slice %50 {offsets = [0, 0], sizes = [8, 384], strides = [1, 1]} : vector<16x384xf32> to vector<8x384xf32>
    %52 = vector.extract_strided_slice %50 {offsets = [8, 0], sizes = [8, 384], strides = [1, 1]} : vector<16x384xf32> to vector<8x384xf32>
    %c0_41 = arith.constant 0 : index
    %c0_42 = arith.constant 0 : index
    %53 = vector.load %arg4[%c0_41, %c0_42] : memref<8x384xf32, #tpu.memory_space<vmem>>, vector<8x384xf32>
    tpu.vector_store %arg4[%c0_41, %c0_42], %51 {strides = array<i32>} : memref<8x384xf32, #tpu.memory_space<vmem>>, vector<8x384xf32>,
    %cst_43 = arith.constant 0.000000e+00 : f32
    %54 = vector.broadcast %cst_43 : f32 to vector<8x384xf32>
    %55 = arith.maximumf %52, %54 : vector<8x384xf32>
    %56 = math.absf %52 : vector<8x384xf32>
    %cst_44 = arith.constant 0.000000e+00 : f32
    %57 = vector.broadcast %cst_44 : f32 to vector<8x384xf32>
    %58 = arith.subf %57, %56 : vector<8x384xf32>
    %59 = math.exp %58 : vector<8x384xf32>
    %60 = math.log1p %59 : vector<8x384xf32>
    %61 = arith.addf %55, %60 : vector<8x384xf32>
    %c0_45 = arith.constant 0 : index
    %c0_46 = arith.constant 0 : index
    %62 = vector.load %arg5[%c0_45, %c0_46] : memref<8x384xf32, #tpu.memory_space<vmem>>, vector<8x384xf32>
    tpu.vector_store %arg5[%c0_45, %c0_46], %61 {strides = array<i32>} : memref<8x384xf32, #tpu.memory_space<vmem>>, vector<8x384xf32>,
    return
  }
  func.func @transform_1(%arg0: i32) -> (i32, i32, i32) {
    %c0_i32 = arith.constant 0 : i32
    %c0_i32_0 = arith.constant 0 : i32
    %c0_i32_1 = arith.constant 0 : i32
    %c0_i32_2 = arith.constant 0 : i32
    return %c0_i32, %c0_i32_0, %c0_i32_1 : i32, i32, i32
  }
  func.func @transform_2(%arg0: i32) -> (i32, i32) {
    %c0_i32 = arith.constant 0 : i32
    %c0_i32_0 = arith.constant 0 : i32
    %c0_i32_1 = arith.constant 0 : i32
    return %c0_i32, %c0_i32_0 : i32, i32
  }
  func.func @transform_3(%arg0: i32) -> (i32, i32) {
    %c0_i32 = arith.constant 0 : i32
    %c0_i32_0 = arith.constant 0 : i32
    return %c0_i32, %arg0 : i32, i32
  }
  func.func @transform_4(%arg0: i32) -> (i32, i32) {
    %c0_i32 = arith.constant 0 : i32
    %c0_i32_0 = arith.constant 0 : i32
    return %c0_i32, %arg0 : i32, i32
  }
}

</mosaic_0001>

<llo_original>
// kernel: tpu_custom_call.1
$region0: #{tpu_custom_call.1}
  #allocation0 [shape = 'u32[]', space=smem, size = 0x4, offset = 0x4, fixed_abs, tag = 'smem constant byte address 0x4 - core index']
  #allocation1 [shape = 'u32[144,128]{1,0:T(1,128)}', space=vmem, size = 0x12000, scoped, tag = 'internal scratch']
  #allocation2 [shape = 'bf16[8,512]{1,0:T(8,128)(2,1)}', space=vmem, size = 0x2000, scoped, tag = 'scratch operand']
  #allocation3 [shape = 's32[1]{0}', space=sflag, size = 0x4, scoped, tag = 'scratch operand']
  #allocation8 [shape = 's32[]', space=sflag, size = 0x4, offset = 0, fixed_abs, tag = 'sflag constant byte address 0x0 - dummy sync flag']
  %s0 = inlined_call_operand.vmem [shape: bf16[8,896], index: 0, kind: input, shape index: {}]
  %s1 = inlined_call_operand.vmem [shape: bf16[9,16,8], index: 1, kind: input, shape index: {}]
  %s2 = inlined_call_operand.vmem [shape: f32[16,1], index: 2, kind: input, shape index: {}]
  %s3 = inlined_call_operand.hbm [shape: f32[8,768], index: 3, kind: output, shape index: {0}]
  %s4 = inlined_call_operand.hbm [shape: f32[8,768], index: 4, kind: output, shape index: {1}]
  %5 = xla_tuple %s3, %s4
  %s6 = sld [smem:[#allocation0]]
  $region83: #{tpu_custom_call.1} parent=0
    _
  %s8 = ssub.s32 1, %s6
  %s9 = scalar_select 0, %s8, %s6
  $region1: #{tpu_custom_call.1} parent=0
    #allocation4 [shape = 'u8[24576]{0}', space=vmem, size = 0x6000, scoped, tag = 'output window, operand 0']
    #allocation5 [shape = 's32[2]{0}', space=sflag, size = 0x8, scoped, tag = 'scoped memory for tpu_custom_call.1']
    #allocation6 [shape = 'u8[24576]{0}', space=vmem, size = 0x6000, scoped, tag = 'output window, operand 1']
    #allocation7 [shape = 's32[2]{0}', space=sflag, size = 0x8, scoped, tag = 'scoped memory for tpu_custom_call.1']
    %10 = vsyncpa [#allocation5], 0
    %s11 = scalar_lea.sflag [#allocation5], 1
    %12 = vsyncpa %s11, 0
    %13 = vsyncpa [#allocation7], 0
    %s14 = scalar_lea.sflag [#allocation7], 1
    %15 = vsyncpa %s14, 0
    loop: start=0, step=1, limit=4
    $region2: #{tpu_custom_call.1} parent=1 // loop_pre_header
      _
    $region3: #{tpu_custom_call.1} parent=1 // loop_header
      %s17 = sphi 0, %s21
      %p18 = scmp.ge.s32.totalorder %s17, 4
      %s25 = sphi 0, %s25
      %s27 = sphi 0, %s25
      %s28 = sphi 0, %s27
      %s42 = sphi 0, %s28
      %s46 = sphi 0, %s46
      %s48 = sphi 0, %s46
      %s49 = sphi 0, %s48
      %s63 = sphi 0, %s49
      %s69 = sphi 0, %s71
      %s72 = sphi 0, %s69
      %s73 = sphi 0, %s72
      %s89 = sphi 0, %s73
      %s95 = sphi 0, %s97
      %s98 = sphi 0, %s95
      %s99 = sphi 0, %s98
      %s115 = sphi 0, %s99
    $region4: #{tpu_custom_call.1} parent=1 // loop_header_branch
      %20 = sbr.rel (%p18) target = $region8
    $region5: #{tpu_custom_call.1} parent=1 // loop_body
      %s22 = ssub.s32 %s17, 1
      %s23 = ssub.s32 %s17, 2
      %s24 = sadd.s32 %s17, 1
      %s26 = sadd.s32 %s25, 1
      %p29 = scmp.eq.s32.totalorder %s17, 1
      %p30 = scmp.ne.s32.totalorder %s25, %s27
      %p31 = scmp.eq.s32.totalorder %s17, 0
      %p32 = por %p30, %p31
      %p33 = scmp.ne.s32.totalorder %s25, %s27
      %p34 = scmp.eq.s32.totalorder %s22, 1
      %p35 = por %p33, %p34
      %p36 = scmp.ne.s32.totalorder %s27, %s28
      %p37 = scmp.eq.s32.totalorder %s22, 0
      %p38 = por %p36, %p37
      %p39 = scmp.ne.s32.totalorder %s27, %s28
      %p40 = scmp.eq.s32.totalorder %s23, 1
      %p41 = por %p39, %p40
      %p43 = scmp.ne.s32.totalorder %s28, %s42
      %p44 = scmp.eq.s32.totalorder %s23, 0
      %p45 = por %p43, %p44
      %s47 = sadd.s32 %s46, 1
      %p50 = scmp.eq.s32.totalorder %s17, 1
      %p51 = scmp.ne.s32.totalorder %s46, %s48
      %p52 = scmp.eq.s32.totalorder %s17, 0
      %p53 = por %p51, %p52
      %p54 = scmp.ne.s32.totalorder %s46, %s48
      %p55 = scmp.eq.s32.totalorder %s22, 1
      %p56 = por %p54, %p55
      %p57 = scmp.ne.s32.totalorder %s48, %s49
      %p58 = scmp.eq.s32.totalorder %s22, 0
      %p59 = por %p57, %p58
      %p60 = scmp.ne.s32.totalorder %s48, %s49
      %p61 = scmp.eq.s32.totalorder %s23, 1
      %p62 = por %p60, %p61
      %p64 = scmp.ne.s32.totalorder %s49, %s63
      %p65 = scmp.eq.s32.totalorder %s23, 0
      %p66 = por %p64, %p65
      %s67 = ssub.s32 %s17, %s24
      %p68 = scmp.eq.s32.totalorder %s67, 0
      %s70 = sadd.s32 %s69, 1
      %s71 = scalar_select %p68, %s69, %s70
      %p74 = pneg %p68
      %p75 = scmp.eq.s32.totalorder %s17, 1
      %p76 = por %p74, %p75
      %p77 = scmp.ne.s32.totalorder %s69, %s72
      %p78 = scmp.eq.s32.totalorder %s17, 0
      %p79 = por %p77, %p78
      %p80 = scmp.ne.s32.totalorder %s69, %s72
      %p81 = scmp.eq.s32.totalorder %s22, 1
      %p82 = por %p80, %p81
      %p83 = scmp.ne.s32.totalorder %s72, %s73
      %p84 = scmp.eq.s32.totalorder %s22, 0
      %p85 = por %p83, %p84
      %p86 = scmp.ne.s32.totalorder %s72, %s73
      %p87 = scmp.eq.s32.totalorder %s23, 1
      %p88 = por %p86, %p87
      %p90 = scmp.ne.s32.totalorder %s73, %s89
      %p91 = scmp.eq.s32.totalorder %s23, 0
      %p92 = por %p90, %p91
      %s93 = ssub.s32 %s17, %s24
      %p94 = scmp.eq.s32.totalorder %s93, 0
      %s96 = sadd.s32 %s95, 1
      %s97 = scalar_select %p94, %s95, %s96
      %p100 = pneg %p94
      %p101 = scmp.eq.s32.totalorder %s17, 1
      %p102 = por %p100, %p101
      %p103 = scmp.ne.s32.totalorder %s95, %s98
      %p104 = scmp.eq.s32.totalorder %s17, 0
      %p105 = por %p103, %p104
      %p106 = scmp.ne.s32.totalorder %s95, %s98
      %p107 = scmp.eq.s32.totalorder %s22, 1
      %p108 = por %p106, %p107
      %p109 = scmp.ne.s32.totalorder %s98, %s99
      %p110 = scmp.eq.s32.totalorder %s22, 0
      %p111 = por %p109, %p110
      %p112 = scmp.ne.s32.totalorder %s98, %s99
      %p113 = scmp.eq.s32.totalorder %s23, 1
      %p114 = por %p112, %p113
      %p116 = scmp.ne.s32.totalorder %s99, %s115
      %p117 = scmp.eq.s32.totalorder %s23, 0
      %p118 = por %p116, %p117
      %p119 = scmp.le.s32.totalorder 1, %s17
      %p120 = scmp.lt.s32.totalorder %s17, 3
      %p121 = pnand %p119, %p120
      %p122 = pneg %p121
      // Predicated region
      $region9: #{tpu_custom_call.1} parent=5 // pred_check
        _
      $region10: #{tpu_custom_call.1} parent=5 // pred_check_branch
        %124 = sbr.rel (%p121) target = $region12
      $region11: #{tpu_custom_call.1} parent=5 // pred_region
        %s125 = ssub.s32 %s17, 1
        // Predicated region
        $region13: #{tpu_custom_call.1} parent=11 // pred_check
          %p126 = pneg %p38
        $region14: #{tpu_custom_call.1} parent=11 // pred_check_branch
          %128 = sbr.rel (%p126) target = $region16
        $region15: #{tpu_custom_call.1} parent=11 // pred_region
          _
        $region16: #{tpu_custom_call.1} parent=11 // pred_fallthru
          _
        // Predicated region
        $region17: #{tpu_custom_call.1} parent=11 // pred_check
          %p129 = pneg %p59
        $region18: #{tpu_custom_call.1} parent=11 // pred_check_branch
          %131 = sbr.rel (%p129) target = $region20
        $region19: #{tpu_custom_call.1} parent=11 // pred_region
          _
        $region20: #{tpu_custom_call.1} parent=11 // pred_fallthru
          _
      $region12: #{tpu_custom_call.1} parent=5 // pred_fallthru
        _
      %p132 = scmp.lt.s32.totalorder %s17, 2
      // Predicated region
      $region21: #{tpu_custom_call.1} parent=5 // pred_check
        %p133 = pneg %p132
      $region22: #{tpu_custom_call.1} parent=5 // pred_check_branch
        %135 = sbr.rel (%p133) target = $region24
      $region23: #{tpu_custom_call.1} parent=5 // pred_region
        _
      $region24: #{tpu_custom_call.1} parent=5 // pred_fallthru
        _
      %p136 = scmp.le.s32.totalorder 1, %s17
      %p137 = scmp.lt.s32.totalorder %s17, 3
      %p138 = pnand %p136, %p137
      %p139 = pneg %p138
      // Predicated region
      $region25: #{tpu_custom_call.1} parent=5 // pred_check
        _
      $region26: #{tpu_custom_call.1} parent=5 // pred_check_branch
        %141 = sbr.rel (%p138) target = $region28
      $region27: #{tpu_custom_call.1} parent=5 // pred_region
        %s142 = ssub.s32 %s17, 1
        %p143 = pneg %p38
        %p144 = pneg %p35
        %p145 = pneg %p59
        %p146 = pneg %p56
        %p147 = pneg %p85
        %p148 = pneg %p82
        %s149 = sand.u32 %s72, 1
        %s150 = scalar_lea.sflag [#allocation5], %s149
        %s151 = sand.u32 %s72, 1
        %s152 = smul.addr %s151, 24
        %s153 = scalar_lea.vmem [#allocation4], %s152
        %p154 = pneg %p111
        %p155 = pneg %p108
        %s156 = sand.u32 %s98, 1
        %s157 = scalar_lea.sflag [#allocation7], %s156
        %s158 = sand.u32 %s98, 1
        %s159 = smul.addr %s158, 24
        %s160 = scalar_lea.vmem [#allocation6], %s159
        %s161 = smul.u32 3, %s22
        %s162 = smul.u32 3, %s22
        %s164 = smul.u32 %s22, 384
        %s165 = sshra.s32 %s164, 7
        %s166 = sand.u32 %s164, 127
        %s167 = smul.addr %s165, 4
        %s168 = scalar_lea.vmem %s0, %s167
        %p170 = scmp.lt.u32.totalorder 16, 8
        %p171 = pneg %p170
        // Predicated region
        $region29: #{tpu_custom_call.1} parent=27 // pred_check
          _
        $region30: #{tpu_custom_call.1} parent=27 // pred_check_branch
          %173 = sbr.rel (%p170) target = $region32
        $region31: #{tpu_custom_call.1} parent=27 // pred_region
          %s188 = sand.u32 16, 7
          %p189 = scmp.eq.s32.totalorder %s188, 0
          // Predicated region
          $region44: #{tpu_custom_call.1} parent=31 // pred_check
            %p190 = pneg %p189
          $region45: #{tpu_custom_call.1} parent=31 // pred_check_branch
            %192 = sbr.rel (%p190) target = $region47
          $region46: #{tpu_custom_call.1} parent=31 // pred_region
            loop: start=0, step=1, limit=1
            $region48: #{tpu_custom_call.1} parent=46 // loop_pre_header
              _
            $region49: #{tpu_custom_call.1} parent=46 // loop_header
              %s194 = sphi 0, %s198
              %p195 = scmp.ge.s32.totalorder %s194, 1
              %s199 = sphi %s168, %s168
              %s200 = sphi [#allocation2], [#allocation2]
            $region50: #{tpu_custom_call.1} parent=46 // loop_header_branch
              %197 = sbr.rel (%p195) target = $region54
            $region51: #{tpu_custom_call.1} parent=46 // loop_body
              %v201 = vld [vmem:[%s199] sm:$0xff]
              %202 = vst [vmem:[%s200] sm:$0xff] %v201
              %v203 = vld [vmem:[%s199 + $0x8] sm:$0xff]
              %204 = vst [vmem:[%s200 + $0x8] sm:$0xff] %v203
            $region52: #{tpu_custom_call.1} parent=46 // loop_footer
              %s198 = sadd.s32 1, %s194
            $region53: #{tpu_custom_call.1} parent=46 // loop_footer_branch
              %193 = sbr.rel target = $region49
            $region54: #{tpu_custom_call.1} parent=46 // loop_exit
              _
          $region47: #{tpu_custom_call.1} parent=31 // pred_fallthru
            _
          %p205 = pneg %p189
          // Predicated region
          $region55: #{tpu_custom_call.1} parent=31 // pred_check
            _
          $region56: #{tpu_custom_call.1} parent=31 // pred_check_branch
            %207 = sbr.rel (%p189) target = $region58
          $region57: #{tpu_custom_call.1} parent=31 // pred_region
            %s208 = sand.u32 16, 7
          $region58: #{tpu_custom_call.1} parent=31 // pred_fallthru
            _
        $region32: #{tpu_custom_call.1} parent=27 // pred_fallthru
          _
        // Predicated region
        $region33: #{tpu_custom_call.1} parent=27 // pred_check
          %p174 = pneg %p170
        $region34: #{tpu_custom_call.1} parent=27 // pred_check_branch
          %176 = sbr.rel (%p174) target = $region36
        $region35: #{tpu_custom_call.1} parent=27 // pred_region
          %s177 = sshllo.u32 0, 16
          loop: start=0, step=1, limit=1
          $region37: #{tpu_custom_call.1} parent=35 // loop_pre_header
            _
          $region38: #{tpu_custom_call.1} parent=35 // loop_header
            %s179 = sphi 0, %s183
            %p180 = scmp.ge.s32.totalorder %s179, 1
            %s184 = sphi %s168, %s168
            %s185 = sphi [#allocation2], [#allocation2]
          $region39: #{tpu_custom_call.1} parent=35 // loop_header_branch
            %182 = sbr.rel (%p180) target = $region43
          $region40: #{tpu_custom_call.1} parent=35 // loop_body
            %v186 = vld [vmem:[%s184] sm:%s177]
            %187 = vst [vmem:[%s185] sm:%s177] %v186
          $region41: #{tpu_custom_call.1} parent=35 // loop_footer
            %s183 = sadd.s32 1, %s179
          $region42: #{tpu_custom_call.1} parent=35 // loop_footer_branch
            %178 = sbr.rel target = $region38
          $region43: #{tpu_custom_call.1} parent=35 // loop_exit
            _
        $region36: #{tpu_custom_call.1} parent=27 // pred_fallthru
          _
        // Predicated region
        $region59: #{tpu_custom_call.1} parent=27 // pred_check
          _
        $region60: #{tpu_custom_call.1} parent=27 // pred_check_branch
          %211 = sbr.rel (0) target = $region62
        $region61: #{tpu_custom_call.1} parent=27 // pred_region
          %212 = vsyncadd [#allocation3], 256
        $region62: #{tpu_custom_call.1} parent=27 // pred_fallthru
          _
        %s213 = smul.u32 4, 1
        %s214 = smul.u32 %s213, 4
        %s215 = sshll.u32 %s214, 4
        %216 = dma.done [#allocation3], %s215
        %v217 = vld [vmem:[#allocation2] sm:$0xff]
        %v218 = vld [vmem:[#allocation2 + $0x8] sm:$0xf]
        %v219 = vld [vmem:[%s1] sm:$0xf]
        %v220 = vld [vmem:[%s1 + $0x4] sm:$0xf]
        %v221 = vld [vmem:[#allocation2] sm:$0xff]
        %v222 = vld [vmem:[#allocation2 + $0x8] sm:$0xff]
        %s223 = scalar_lea.vmem %s1, 8
        %v224 = vld [vmem:[%s223] sm:$0xf]
        %v225 = vld [vmem:[%s223 + $0x4] sm:$0xf]
        %v228 = vunpack.c.l.b16 %v224
        %v229 = vunpack.c.l.b16 %v225
        %v230 = vpack.c.b16 %v229, %v228
        %v233 = vunpack.c.l.b16 %v221
        %v234 = vunpack.c.h.b16 %v221
        %v235 = vunpack.c.l.b16 %v222
        %v236 = vunpack.c.h.b16 %v222
        %v237 = vpack.c.b16 %v233, %v233
        %v238 = vpack.c.b16 %v234, %v234
        %v239 = vpack.c.b16 %v235, %v235
        %v240 = vpack.c.b16 %v236, %v236
        %241 = vrot.lane.b32.xlu0 %v237, 127
        %v242 = vpop.permute.xlu0 %241
        %243 = vrot.lane.b32.xlu0 %v238, 127
        %v244 = vpop.permute.xlu0 %243
        %245 = vrot.lane.b32.xlu0 %v239, 127
        %v246 = vpop.permute.xlu0 %245
        %247 = vrot.lane.b32.xlu0 %v240, 127
        %v248 = vpop.permute.xlu0 %247
        %vm249 = vcmask 1039360
        %v250 = vsel %vm249, %v242, %v244
        %v251 = vsel %vm249, %v244, %v246
        %v252 = vsel %vm249, %v246, %v248
        %vm253 = vcmask 64512
        %v255 = vsel %vm253, %v230, 0
        %vm257 = vcmask 1043456
        %v259 = vsel %vm257, %v250, 0
        %v262 = vsel %vm257, %v251, 0
        %v265 = vsel %vm257, %v252, 0
        %267 = vmatprep.subr.bf16.mxu0 %v262
        %268 = vmatpush1.bf16.msra.mxu0 %v259
        %269 = vmatprep.subr.bf16.mxu0 0
        %270 = vmatpush1.bf16.msra.mxu0 0
        %271 = vmatprep.subr.bf16.mxu0 0
        %272 = vmatpush1.bf16.msra.mxu0 0
        %273 = vmatprep.subr.bf16.mxu0 0
        %274 = vmatpush1.bf16.msra.mxu0 0
        %275 = vmatprep.subr.bf16.mxu0 0
        %276 = vmatpush1.bf16.msra.mxu0 0
        %277 = vmatprep.subr.bf16.mxu0 0
        %278 = vmatpush1.bf16.msra.mxu0 0
        %279 = vmatprep.subr.bf16.mxu0 0
        %280 = vmatpush1.bf16.msra.mxu0 0
        %281 = vmatprep.subr.bf16.mxu0 0
        %282 = vmatpush1.bf16.msra.mxu0 0
        %283 = vmatprep.subr.bf16.mxu0 0
        %284 = vmatpush1.bf16.msra.mxu0 0
        %285 = vmatprep.subr.bf16.mxu0 0
        %286 = vmatpush1.bf16.msra.mxu0 0
        %287 = vmatprep.subr.bf16.mxu0 0
        %288 = vmatpush1.bf16.msra.mxu0 0
        %289 = vmatprep.subr.bf16.mxu0 0
        %290 = vmatpush1.bf16.msra.mxu0 0
        %291 = vmatprep.subr.bf16.mxu0 0
        %292 = vmatpush1.bf16.msra.mxu0 0
        %293 = vmatprep.subr.bf16.mxu0 0
        %294 = vmatpush1.bf16.msra.mxu0 0
        %295 = vmatprep.subr.bf16.mxu0 0
        %296 = vmatpush1.bf16.msra.mxu0 0
        %297 = vmatprep.subr.bf16.mxu0 0
        %298 = vmatpush1.bf16.msra.mxu0 0
        %299 = vmatprep.mubr.bf16.mxu0 0
        %300 = vmatmul.mubr.bf16.gmra.mrb[0].mxu0 %v255
        %v301 = vpop.f32.mrb[0].mxu0
        %v302 = vadd.f32 0.0, %v301
        %v303 = vpop.f32.mrb[0].mxu0
        %v304 = vadd.f32 0.0, %v303
        %v305 = vpop.f32.mrb[0].mxu0
        %v306 = vadd.f32 0.0, %v305
        %v307 = vpop.f32.mrb[0].mxu0
        %v308 = vadd.f32 0.0, %v307
        %309 = vdwg.mxu0
        %310 = vmatprep.subr.bf16.mxu0 0
        %311 = vmatpush1.bf16.msra.mxu0 %v265
        %312 = vmatprep.subr.bf16.mxu0 0
        %313 = vmatpush1.bf16.msra.mxu0 0
        %314 = vmatprep.subr.bf16.mxu0 0
        %315 = vmatpush1.bf16.msra.mxu0 0
        %316 = vmatprep.subr.bf16.mxu0 0
        %317 = vmatpush1.bf16.msra.mxu0 0
        %318 = vmatprep.subr.bf16.mxu0 0
        %319 = vmatpush1.bf16.msra.mxu0 0
        %320 = vmatprep.subr.bf16.mxu0 0
        %321 = vmatpush1.bf16.msra.mxu0 0
        %322 = vmatprep.subr.bf16.mxu0 0
        %323 = vmatpush1.bf16.msra.mxu0 0
        %324 = vmatprep.subr.bf16.mxu0 0
        %325 = vmatpush1.bf16.msra.mxu0 0
        %326 = vmatprep.subr.bf16.mxu0 0
        %327 = vmatpush1.bf16.msra.mxu0 0
        %328 = vmatprep.subr.bf16.mxu0 0
        %329 = vmatpush1.bf16.msra.mxu0 0
        %330 = vmatprep.subr.bf16.mxu0 0
        %331 = vmatpush1.bf16.msra.mxu0 0
        %332 = vmatprep.subr.bf16.mxu0 0
        %333 = vmatpush1.bf16.msra.mxu0 0
        %334 = vmatprep.subr.bf16.mxu0 0
        %335 = vmatpush1.bf16.msra.mxu0 0
        %336 = vmatprep.subr.bf16.mxu0 0
        %337 = vmatpush1.bf16.msra.mxu0 0
        %338 = vmatprep.subr.bf16.mxu0 0
        %339 = vmatpush1.bf16.msra.mxu0 0
        %340 = vmatprep.subr.bf16.mxu0 0
        %341 = vmatpush1.bf16.msra.mxu0 0
        %342 = vmatprep.mubr.bf16.mxu0 0
        %343 = vmatmul.mubr.bf16.gmra.mrb[0].mxu0 %v255
        %v344 = vpop.f32.mrb[0].mxu0
        %v345 = vadd.f32 0.0, %v344
        %v346 = vpop.f32.mrb[0].mxu0
        %v347 = vpop.f32.mrb[0].mxu0
        %v348 = vadd.f32 0.0, %v347
        %v349 = vpop.f32.mrb[0].mxu0
        %350 = vdwg.mxu0
        %v353 = vunpack.c.l.b16 %v219
        %v354 = vunpack.c.l.b16 %v220
        %v355 = vpack.c.b16 %v354, %v353
        %v358 = vunpack.c.l.b16 %v217
        %v359 = vunpack.c.h.b16 %v217
        %v360 = vunpack.c.l.b16 %v218
        %v361 = vpack.c.b16 %v358, %v358
        %v362 = vpack.c.b16 %v359, %v359
        %v363 = vpack.c.b16 %v360, %v360
        %v365 = vsel %vm253, %v355, 0
        %v368 = vsel %vm257, %v361, 0
        %v371 = vsel %vm257, %v362, 0
        %v374 = vsel %vm257, %v363, 0
        %376 = vmatprep.subr.bf16.mxu0 %v371
        %377 = vmatpush1.bf16.msra.mxu0 %v368
        %378 = vmatprep.subr.bf16.mxu0 0
        %379 = vmatpush1.bf16.msra.mxu0 0
        %380 = vmatprep.subr.bf16.mxu0 0
        %381 = vmatpush1.bf16.msra.mxu0 0
        %382 = vmatprep.subr.bf16.mxu0 0
        %383 = vmatpush1.bf16.msra.mxu0 0
        %384 = vmatprep.subr.bf16.mxu0 0
        %385 = vmatpush1.bf16.msra.mxu0 0
        %386 = vmatprep.subr.bf16.mxu0 0
        %387 = vmatpush1.bf16.msra.mxu0 0
        %388 = vmatprep.subr.bf16.mxu0 0
        %389 = vmatpush1.bf16.msra.mxu0 0
        %390 = vmatprep.subr.bf16.mxu0 0
        %391 = vmatpush1.bf16.msra.mxu0 0
        %392 = vmatprep.subr.bf16.mxu0 0
        %393 = vmatpush1.bf16.msra.mxu0 0
        %394 = vmatprep.subr.bf16.mxu0 0
        %395 = vmatpush1.bf16.msra.mxu0 0
        %396 = vmatprep.subr.bf16.mxu0 0
        %397 = vmatpush1.bf16.msra.mxu0 0
        %398 = vmatprep.subr.bf16.mxu0 0
        %399 = vmatpush1.bf16.msra.mxu0 0
        %400 = vmatprep.subr.bf16.mxu0 0
        %401 = vmatpush1.bf16.msra.mxu0 0
        %402 = vmatprep.subr.bf16.mxu0 0
        %403 = vmatpush1.bf16.msra.mxu0 0
        %404 = vmatprep.subr.bf16.mxu0 0
        %405 = vmatpush1.bf16.msra.mxu0 0
        %406 = vmatprep.subr.bf16.mxu0 0
        %407 = vmatpush1.bf16.msra.mxu0 0
        %408 = vmatprep.mubr.bf16.mxu0 0
        %409 = vmatmul.mubr.bf16.gmra.mrb[0].mxu0 %v365
        %v410 = vpop.f32.mrb[0].mxu0
        %v411 = vadd.f32 %v302, %v410
        %v412 = vpop.f32.mrb[0].mxu0
        %v413 = vadd.f32 %v304, %v412
        %v414 = vpop.f32.mrb[0].mxu0
        %v415 = vadd.f32 %v306, %v414
        %v416 = vpop.f32.mrb[0].mxu0
        %v417 = vadd.f32 %v308, %v416
        %418 = vdwg.mxu0
        %419 = vmatprep.subr.bf16.mxu0 0
        %420 = vmatpush1.bf16.msra.mxu0 %v374
        %421 = vmatprep.subr.bf16.mxu0 0
        %422 = vmatpush1.bf16.msra.mxu0 0
        %423 = vmatprep.subr.bf16.mxu0 0
        %424 = vmatpush1.bf16.msra.mxu0 0
        %425 = vmatprep.subr.bf16.mxu0 0
        %426 = vmatpush1.bf16.msra.mxu0 0
        %427 = vmatprep.subr.bf16.mxu0 0
        %428 = vmatpush1.bf16.msra.mxu0 0
        %429 = vmatprep.subr.bf16.mxu0 0
        %430 = vmatpush1.bf16.msra.mxu0 0
        %431 = vmatprep.subr.bf16.mxu0 0
        %432 = vmatpush1.bf16.msra.mxu0 0
        %433 = vmatprep.subr.bf16.mxu0 0
        %434 = vmatpush1.bf16.msra.mxu0 0
        %435 = vmatprep.subr.bf16.mxu0 0
        %436 = vmatpush1.bf16.msra.mxu0 0
        %437 = vmatprep.subr.bf16.mxu0 0
        %438 = vmatpush1.bf16.msra.mxu0 0
        %439 = vmatprep.subr.bf16.mxu0 0
        %440 = vmatpush1.bf16.msra.mxu0 0
        %441 = vmatprep.subr.bf16.mxu0 0
        %442 = vmatpush1.bf16.msra.mxu0 0
        %443 = vmatprep.subr.bf16.mxu0 0
        %444 = vmatpush1.bf16.msra.mxu0 0
        %445 = vmatprep.subr.bf16.mxu0 0
        %446 = vmatpush1.bf16.msra.mxu0 0
        %447 = vmatprep.subr.bf16.mxu0 0
        %448 = vmatpush1.bf16.msra.mxu0 0
        %449 = vmatprep.subr.bf16.mxu0 0
        %450 = vmatpush1.bf16.msra.mxu0 0
        %451 = vmatprep.mubr.bf16.mxu0 0
        %452 = vmatmul.mubr.bf16.gmra.mrb[0].mxu0 %v365
        %v453 = vpop.f32.mrb[0].mxu0
        %v454 = vadd.f32 %v345, %v453
        %v455 = vpop.f32.mrb[0].mxu0
        %v456 = vpop.f32.mrb[0].mxu0
        %v457 = vadd.f32 %v348, %v456
        %v458 = vpop.f32.mrb[0].mxu0
        %459 = vdwg.mxu0
        %s460 = scalar_lea.vmem %s1, 16
        %v461 = vld [vmem:[%s460] sm:$0xf]
        %v462 = vld [vmem:[%s460 + $0x4] sm:$0xf]
        %v465 = vunpack.c.l.b16 %v461
        %v466 = vunpack.c.l.b16 %v462
        %v467 = vpack.c.b16 %v466, %v465
        %468 = vrot.lane.b32.xlu0 %v237, 126
        %v469 = vpop.permute.xlu0 %468
        %470 = vrot.lane.b32.xlu0 %v238, 126
        %v471 = vpop.permute.xlu0 %470
        %472 = vrot.lane.b32.xlu0 %v239, 126
        %v473 = vpop.permute.xlu0 %472
        %474 = vrot.lane.b32.xlu0 %v240, 126
        %v475 = vpop.permute.xlu0 %474
        %vm476 = vcmask 1031168
        %v477 = vsel %vm476, %v469, %v471
        %v478 = vsel %vm476, %v471, %v473
        %v479 = vsel %vm476, %v473, %v475
        %v481 = vsel %vm253, %v467, 0
        %v484 = vsel %vm257, %v477, 0
        %v487 = vsel %vm257, %v478, 0
        %v490 = vsel %vm257, %v479, 0
        %492 = vmatprep.subr.bf16.mxu0 %v487
        %493 = vmatpush1.bf16.msra.mxu0 %v484
        %494 = vmatprep.subr.bf16.mxu0 0
        %495 = vmatpush1.bf16.msra.mxu0 0
        %496 = vmatprep.subr.bf16.mxu0 0
        %497 = vmatpush1.bf16.msra.mxu0 0
        %498 = vmatprep.subr.bf16.mxu0 0
        %499 = vmatpush1.bf16.msra.mxu0 0
        %500 = vmatprep.subr.bf16.mxu0 0
        %501 = vmatpush1.bf16.msra.mxu0 0
        %502 = vmatprep.subr.bf16.mxu0 0
        %503 = vmatpush1.bf16.msra.mxu0 0
        %504 = vmatprep.subr.bf16.mxu0 0
        %505 = vmatpush1.bf16.msra.mxu0 0
        %506 = vmatprep.subr.bf16.mxu0 0
        %507 = vmatpush1.bf16.msra.mxu0 0
        %508 = vmatprep.subr.bf16.mxu0 0
        %509 = vmatpush1.bf16.msra.mxu0 0
        %510 = vmatprep.subr.bf16.mxu0 0
        %511 = vmatpush1.bf16.msra.mxu0 0
        %512 = vmatprep.subr.bf16.mxu0 0
        %513 = vmatpush1.bf16.msra.mxu0 0
        %514 = vmatprep.subr.bf16.mxu0 0
        %515 = vmatpush1.bf16.msra.mxu0 0
        %516 = vmatprep.subr.bf16.mxu0 0
        %517 = vmatpush1.bf16.msra.mxu0 0
        %518 = vmatprep.subr.bf16.mxu0 0
        %519 = vmatpush1.bf16.msra.mxu0 0
        %520 = vmatprep.subr.bf16.mxu0 0
        %521 = vmatpush1.bf16.msra.mxu0 0
        %522 = vmatprep.subr.bf16.mxu0 0
        %523 = vmatpush1.bf16.msra.mxu0 0
        %524 = vmatprep.mubr.bf16.mxu0 0
        %525 = vmatmul.mubr.bf16.gmra.mrb[0].mxu0 %v481
        %v526 = vpop.f32.mrb[0].mxu0
        %v527 = vadd.f32 0.0, %v526
        %v528 = vpop.f32.mrb[0].mxu0
        %v529 = vadd.f32 0.0, %v528
        %v530 = vpop.f32.mrb[0].mxu0
        %v531 = vadd.f32 0.0, %v530
        %v532 = vpop.f32.mrb[0].mxu0
        %v533 = vadd.f32 0.0, %v532
        %534 = vdwg.mxu0
        %535 = vmatprep.subr.bf16.mxu0 0
        %536 = vmatpush1.bf16.msra.mxu0 %v490
        %537 = vmatprep.subr.bf16.mxu0 0
        %538 = vmatpush1.bf16.msra.mxu0 0
        %539 = vmatprep.subr.bf16.mxu0 0
        %540 = vmatpush1.bf16.msra.mxu0 0
        %541 = vmatprep.subr.bf16.mxu0 0
        %542 = vmatpush1.bf16.msra.mxu0 0
        %543 = vmatprep.subr.bf16.mxu0 0
        %544 = vmatpush1.bf16.msra.mxu0 0
        %545 = vmatprep.subr.bf16.mxu0 0
        %546 = vmatpush1.bf16.msra.mxu0 0
        %547 = vmatprep.subr.bf16.mxu0 0
        %548 = vmatpush1.bf16.msra.mxu0 0
        %549 = vmatprep.subr.bf16.mxu0 0
        %550 = vmatpush1.bf16.msra.mxu0 0
        %551 = vmatprep.subr.bf16.mxu0 0
        %552 = vmatpush1.bf16.msra.mxu0 0
        %553 = vmatprep.subr.bf16.mxu0 0
        %554 = vmatpush1.bf16.msra.mxu0 0
        %555 = vmatprep.subr.bf16.mxu0 0
        %556 = vmatpush1.bf16.msra.mxu0 0
        %557 = vmatprep.subr.bf16.mxu0 0
        %558 = vmatpush1.bf16.msra.mxu0 0
        %559 = vmatprep.subr.bf16.mxu0 0
        %560 = vmatpush1.bf16.msra.mxu0 0
        %561 = vmatprep.subr.bf16.mxu0 0
        %562 = vmatpush1.bf16.msra.mxu0 0
        %563 = vmatprep.subr.bf16.mxu0 0
        %564 = vmatpush1.bf16.msra.mxu0 0
        %565 = vmatprep.subr.bf16.mxu0 0
        %566 = vmatpush1.bf16.msra.mxu0 0
        %567 = vmatprep.mubr.bf16.mxu0 0
        %568 = vmatmul.mubr.bf16.gmra.mrb[0].mxu0 %v481
        %v569 = vpop.f32.mrb[0].mxu0
        %v570 = vadd.f32 0.0, %v569
        %v571 = vpop.f32.mrb[0].mxu0
        %v572 = vpop.f32.mrb[0].mxu0
        %v573 = vadd.f32 0.0, %v572
        %v574 = vpop.f32.mrb[0].mxu0
        %575 = vdwg.mxu0
        %v576 = vadd.f32 %v411, %v527
        %v577 = vadd.f32 %v413, %v529
        %v578 = vadd.f32 %v454, %v570
        %v579 = vadd.f32 %v415, %v531
        %v580 = vadd.f32 %v417, %v533
        %v581 = vadd.f32 %v457, %v573
        %s582 = scalar_lea.vmem %s1, 24
        %v583 = vld [vmem:[%s582] sm:$0xf]
        %v584 = vld [vmem:[%s582 + $0x4] sm:$0xf]
        %v587 = vunpack.c.l.b16 %v583
        %v588 = vunpack.c.l.b16 %v584
        %v589 = vpack.c.b16 %v588, %v587
        %590 = vrot.lane.b32.xlu0 %v237, 110
        %v591 = vpop.permute.xlu0 %590
        %592 = vrot.lane.b32.xlu0 %v238, 110
        %v593 = vpop.permute.xlu0 %592
        %594 = vrot.lane.b32.xlu0 %v239, 110
        %v595 = vpop.permute.xlu0 %594
        %596 = vrot.lane.b32.xlu0 %v240, 110
        %v597 = vpop.permute.xlu0 %596
        %vm598 = vcmask 900096
        %v599 = vsel %vm598, %v591, %v593
        %v600 = vsel %vm598, %v593, %v595
        %v601 = vsel %vm598, %v595, %v597
        %v603 = vsel %vm253, %v589, 0
        %v606 = vsel %vm257, %v599, 0
        %v609 = vsel %vm257, %v600, 0
        %v612 = vsel %vm257, %v601, 0
        %614 = vmatprep.subr.bf16.mxu0 %v609
        %615 = vmatpush1.bf16.msra.mxu0 %v606
        %616 = vmatprep.subr.bf16.mxu0 0
        %617 = vmatpush1.bf16.msra.mxu0 0
        %618 = vmatprep.subr.bf16.mxu0 0
        %619 = vmatpush1.bf16.msra.mxu0 0
        %620 = vmatprep.subr.bf16.mxu0 0
        %621 = vmatpush1.bf16.msra.mxu0 0
        %622 = vmatprep.subr.bf16.mxu0 0
        %623 = vmatpush1.bf16.msra.mxu0 0
        %624 = vmatprep.subr.bf16.mxu0 0
        %625 = vmatpush1.bf16.msra.mxu0 0
        %626 = vmatprep.subr.bf16.mxu0 0
        %627 = vmatpush1.bf16.msra.mxu0 0
        %628 = vmatprep.subr.bf16.mxu0 0
        %629 = vmatpush1.bf16.msra.mxu0 0
        %630 = vmatprep.subr.bf16.mxu0 0
        %631 = vmatpush1.bf16.msra.mxu0 0
        %632 = vmatprep.subr.bf16.mxu0 0
        %633 = vmatpush1.bf16.msra.mxu0 0
        %634 = vmatprep.subr.bf16.mxu0 0
        %635 = vmatpush1.bf16.msra.mxu0 0
        %636 = vmatprep.subr.bf16.mxu0 0
        %637 = vmatpush1.bf16.msra.mxu0 0
        %638 = vmatprep.subr.bf16.mxu0 0
        %639 = vmatpush1.bf16.msra.mxu0 0
        %640 = vmatprep.subr.bf16.mxu0 0
        %641 = vmatpush1.bf16.msra.mxu0 0
        %642 = vmatprep.subr.bf16.mxu0 0
        %643 = vmatpush1.bf16.msra.mxu0 0
        %644 = vmatprep.subr.bf16.mxu0 0
        %645 = vmatpush1.bf16.msra.mxu0 0
        %646 = vmatprep.mubr.bf16.mxu0 0
        %647 = vmatmul.mubr.bf16.gmra.mrb[0].mxu0 %v603
        %v648 = vpop.f32.mrb[0].mxu0
        %v649 = vadd.f32 0.0, %v648
        %v650 = vpop.f32.mrb[0].mxu0
        %v651 = vadd.f32 0.0, %v650
        %v652 = vpop.f32.mrb[0].mxu0
        %v653 = vadd.f32 0.0, %v652
        %v654 = vpop.f32.mrb[0].mxu0
        %v655 = vadd.f32 0.0, %v654
        %656 = vdwg.mxu0
        %657 = vmatprep.subr.bf16.mxu0 0
        %658 = vmatpush1.bf16.msra.mxu0 %v612
        %659 = vmatprep.subr.bf16.mxu0 0
        %660 = vmatpush1.bf16.msra.mxu0 0
        %661 = vmatprep.subr.bf16.mxu0 0
        %662 = vmatpush1.bf16.msra.mxu0 0
        %663 = vmatprep.subr.bf16.mxu0 0
        %664 = vmatpush1.bf16.msra.mxu0 0
        %665 = vmatprep.subr.bf16.mxu0 0
        %666 = vmatpush1.bf16.msra.mxu0 0
        %667 = vmatprep.subr.bf16.mxu0 0
        %668 = vmatpush1.bf16.msra.mxu0 0
        %669 = vmatprep.subr.bf16.mxu0 0
        %670 = vmatpush1.bf16.msra.mxu0 0
        %671 = vmatprep.subr.bf16.mxu0 0
        %672 = vmatpush1.bf16.msra.mxu0 0
        %673 = vmatprep.subr.bf16.mxu0 0
        %674 = vmatpush1.bf16.msra.mxu0 0
        %675 = vmatprep.subr.bf16.mxu0 0
        %676 = vmatpush1.bf16.msra.mxu0 0
        %677 = vmatprep.subr.bf16.mxu0 0
        %678 = vmatpush1.bf16.msra.mxu0 0
        %679 = vmatprep.subr.bf16.mxu0 0
        %680 = vmatpush1.bf16.msra.mxu0 0
        %681 = vmatprep.subr.bf16.mxu0 0
        %682 = vmatpush1.bf16.msra.mxu0 0
        %683 = vmatprep.subr.bf16.mxu0 0
        %684 = vmatpush1.bf16.msra.mxu0 0
        %685 = vmatprep.subr.bf16.mxu0 0
        %686 = vmatpush1.bf16.msra.mxu0 0
        %687 = vmatprep.subr.bf16.mxu0 0
        %688 = vmatpush1.bf16.msra.mxu0 0
        %689 = vmatprep.mubr.bf16.mxu0 0
        %690 = vmatmul.mubr.bf16.gmra.mrb[0].mxu0 %v603
        %v691 = vpop.f32.mrb[0].mxu0
        %v692 = vadd.f32 0.0, %v691
        %v693 = vpop.f32.mrb[0].mxu0
        %v694 = vpop.f32.mrb[0].mxu0
        %v695 = vadd.f32 0.0, %v694
        %v696 = vpop.f32.mrb[0].mxu0
        %697 = vdwg.mxu0
        %v698 = vadd.f32 %v576, %v649
        %v699 = vadd.f32 %v577, %v651
        %v700 = vadd.f32 %v578, %v692
        %v701 = vadd.f32 %v579, %v653
        %v702 = vadd.f32 %v580, %v655
        %v703 = vadd.f32 %v581, %v695
        %s704 = scalar_lea.vmem %s1, 32
        %v705 = vld [vmem:[%s704] sm:$0xf]
        %v706 = vld [vmem:[%s704 + $0x4] sm:$0xf]
        %v709 = vunpack.c.l.b16 %v705
        %v710 = vunpack.c.l.b16 %v706
        %v711 = vpack.c.b16 %v710, %v709
        %712 = vrot.lane.b32.xlu0 %v237, 109
        %v713 = vpop.permute.xlu0 %712
        %714 = vrot.lane.b32.xlu0 %v238, 109
        %v715 = vpop.permute.xlu0 %714
        %716 = vrot.lane.b32.xlu0 %v239, 109
        %v717 = vpop.permute.xlu0 %716
        %718 = vrot.lane.b32.xlu0 %v240, 109
        %v719 = vpop.permute.xlu0 %718
        %vm720 = vcmask 891904
        %v721 = vsel %vm720, %v713, %v715
        %v722 = vsel %vm720, %v715, %v717
        %v723 = vsel %vm720, %v717, %v719
        %v725 = vsel %vm253, %v711, 0
        %v728 = vsel %vm257, %v721, 0
        %v731 = vsel %vm257, %v722, 0
        %v734 = vsel %vm257, %v723, 0
        %736 = vmatprep.subr.bf16.mxu0 %v731
        %737 = vmatpush1.bf16.msra.mxu0 %v728
        %738 = vmatprep.subr.bf16.mxu0 0
        %739 = vmatpush1.bf16.msra.mxu0 0
        %740 = vmatprep.subr.bf16.mxu0 0
        %741 = vmatpush1.bf16.msra.mxu0 0
        %742 = vmatprep.subr.bf16.mxu0 0
        %743 = vmatpush1.bf16.msra.mxu0 0
        %744 = vmatprep.subr.bf16.mxu0 0
        %745 = vmatpush1.bf16.msra.mxu0 0
        %746 = vmatprep.subr.bf16.mxu0 0
        %747 = vmatpush1.bf16.msra.mxu0 0
        %748 = vmatprep.subr.bf16.mxu0 0
        %749 = vmatpush1.bf16.msra.mxu0 0
        %750 = vmatprep.subr.bf16.mxu0 0
        %751 = vmatpush1.bf16.msra.mxu0 0
        %752 = vmatprep.subr.bf16.mxu0 0
        %753 = vmatpush1.bf16.msra.mxu0 0
        %754 = vmatprep.subr.bf16.mxu0 0
        %755 = vmatpush1.bf16.msra.mxu0 0
        %756 = vmatprep.subr.bf16.mxu0 0
        %757 = vmatpush1.bf16.msra.mxu0 0
        %758 = vmatprep.subr.bf16.mxu0 0
        %759 = vmatpush1.bf16.msra.mxu0 0
        %760 = vmatprep.subr.bf16.mxu0 0
        %761 = vmatpush1.bf16.msra.mxu0 0
        %762 = vmatprep.subr.bf16.mxu0 0
        %763 = vmatpush1.bf16.msra.mxu0 0
        %764 = vmatprep.subr.bf16.mxu0 0
        %765 = vmatpush1.bf16.msra.mxu0 0
        %766 = vmatprep.subr.bf16.mxu0 0
        %767 = vmatpush1.bf16.msra.mxu0 0
        %768 = vmatprep.mubr.bf16.mxu0 0
        %769 = vmatmul.mubr.bf16.gmra.mrb[0].mxu0 %v725
        %v770 = vpop.f32.mrb[0].mxu0
        %v771 = vadd.f32 0.0, %v770
        %v772 = vpop.f32.mrb[0].mxu0
        %v773 = vadd.f32 0.0, %v772
        %v774 = vpop.f32.mrb[0].mxu0
        %v775 = vadd.f32 0.0, %v774
        %v776 = vpop.f32.mrb[0].mxu0
        %v777 = vadd.f32 0.0, %v776
        %778 = vdwg.mxu0
        %779 = vmatprep.subr.bf16.mxu0 0
        %780 = vmatpush1.bf16.msra.mxu0 %v734
        %781 = vmatprep.subr.bf16.mxu0 0
        %782 = vmatpush1.bf16.msra.mxu0 0
        %783 = vmatprep.subr.bf16.mxu0 0
        %784 = vmatpush1.bf16.msra.mxu0 0
        %785 = vmatprep.subr.bf16.mxu0 0
        %786 = vmatpush1.bf16.msra.mxu0 0
        %787 = vmatprep.subr.bf16.mxu0 0
        %788 = vmatpush1.bf16.msra.mxu0 0
        %789 = vmatprep.subr.bf16.mxu0 0
        %790 = vmatpush1.bf16.msra.mxu0 0
        %791 = vmatprep.subr.bf16.mxu0 0
        %792 = vmatpush1.bf16.msra.mxu0 0
        %793 = vmatprep.subr.bf16.mxu0 0
        %794 = vmatpush1.bf16.msra.mxu0 0
        %795 = vmatprep.subr.bf16.mxu0 0
        %796 = vmatpush1.bf16.msra.mxu0 0
        %797 = vmatprep.subr.bf16.mxu0 0
        %798 = vmatpush1.bf16.msra.mxu0 0
        %799 = vmatprep.subr.bf16.mxu0 0
        %800 = vmatpush1.bf16.msra.mxu0 0
        %801 = vmatprep.subr.bf16.mxu0 0
        %802 = vmatpush1.bf16.msra.mxu0 0
        %803 = vmatprep.subr.bf16.mxu0 0
        %804 = vmatpush1.bf16.msra.mxu0 0
        %805 = vmatprep.subr.bf16.mxu0 0
        %806 = vmatpush1.bf16.msra.mxu0 0
        %807 = vmatprep.subr.bf16.mxu0 0
        %808 = vmatpush1.bf16.msra.mxu0 0
        %809 = vmatprep.subr.bf16.mxu0 0
        %810 = vmatpush1.bf16.msra.mxu0 0
        %811 = vmatprep.mubr.bf16.mxu0 0
        %812 = vmatmul.mubr.bf16.gmra.mrb[0].mxu0 %v725
        %v813 = vpop.f32.mrb[0].mxu0
        %v814 = vadd.f32 0.0, %v813
        %v815 = vpop.f32.mrb[0].mxu0
        %v816 = vpop.f32.mrb[0].mxu0
        %v817 = vadd.f32 0.0, %v816
        %v818 = vpop.f32.mrb[0].mxu0
        %819 = vdwg.mxu0
        %v820 = vadd.f32 %v698, %v771
        %v821 = vadd.f32 %v699, %v773
        %v822 = vadd.f32 %v700, %v814
        %v823 = vadd.f32 %v701, %v775
        %v824 = vadd.f32 %v702, %v777
        %v825 = vadd.f32 %v703, %v817
        %s826 = scalar_lea.vmem %s1, 40
        %v827 = vld [vmem:[%s826] sm:$0xf]
        %v828 = vld [vmem:[%s826 + $0x4] sm:$0xf]
        %v831 = vunpack.c.l.b16 %v827
        %v832 = vunpack.c.l.b16 %v828
        %v833 = vpack.c.b16 %v832, %v831
        %834 = vrot.lane.b32.xlu0 %v237, 108
        %v835 = vpop.permute.xlu0 %834
        %836 = vrot.lane.b32.xlu0 %v238, 108
        %v837 = vpop.permute.xlu0 %836
        %838 = vrot.lane.b32.xlu0 %v239, 108
        %v839 = vpop.permute.xlu0 %838
        %840 = vrot.lane.b32.xlu0 %v240, 108
        %v841 = vpop.permute.xlu0 %840
        %vm842 = vcmask 883712
        %v843 = vsel %vm842, %v835, %v837
        %v844 = vsel %vm842, %v837, %v839
        %v845 = vsel %vm842, %v839, %v841
        %v847 = vsel %vm253, %v833, 0
        %v850 = vsel %vm257, %v843, 0
        %v853 = vsel %vm257, %v844, 0
        %v856 = vsel %vm257, %v845, 0
        %858 = vmatprep.subr.bf16.mxu0 %v853
        %859 = vmatpush1.bf16.msra.mxu0 %v850
        %860 = vmatprep.subr.bf16.mxu0 0
        %861 = vmatpush1.bf16.msra.mxu0 0
        %862 = vmatprep.subr.bf16.mxu0 0
        %863 = vmatpush1.bf16.msra.mxu0 0
        %864 = vmatprep.subr.bf16.mxu0 0
        %865 = vmatpush1.bf16.msra.mxu0 0
        %866 = vmatprep.subr.bf16.mxu0 0
        %867 = vmatpush1.bf16.msra.mxu0 0
        %868 = vmatprep.subr.bf16.mxu0 0
        %869 = vmatpush1.bf16.msra.mxu0 0
        %870 = vmatprep.subr.bf16.mxu0 0
        %871 = vmatpush1.bf16.msra.mxu0 0
        %872 = vmatprep.subr.bf16.mxu0 0
        %873 = vmatpush1.bf16.msra.mxu0 0
        %874 = vmatprep.subr.bf16.mxu0 0
        %875 = vmatpush1.bf16.msra.mxu0 0
        %876 = vmatprep.subr.bf16.mxu0 0
        %877 = vmatpush1.bf16.msra.mxu0 0
        %878 = vmatprep.subr.bf16.mxu0 0
        %879 = vmatpush1.bf16.msra.mxu0 0
        %880 = vmatprep.subr.bf16.mxu0 0
        %881 = vmatpush1.bf16.msra.mxu0 0
        %882 = vmatprep.subr.bf16.mxu0 0
        %883 = vmatpush1.bf16.msra.mxu0 0
        %884 = vmatprep.subr.bf16.mxu0 0
        %885 = vmatpush1.bf16.msra.mxu0 0
        %886 = vmatprep.subr.bf16.mxu0 0
        %887 = vmatpush1.bf16.msra.mxu0 0
        %888 = vmatprep.subr.bf16.mxu0 0
        %889 = vmatpush1.bf16.msra.mxu0 0
        %890 = vmatprep.mubr.bf16.mxu0 0
        %891 = vmatmul.mubr.bf16.gmra.mrb[0].mxu0 %v847
        %v892 = vpop.f32.mrb[0].mxu0
        %v893 = vadd.f32 0.0, %v892
        %v894 = vpop.f32.mrb[0].mxu0
        %v895 = vadd.f32 0.0, %v894
        %v896 = vpop.f32.mrb[0].mxu0
        %v897 = vadd.f32 0.0, %v896
        %v898 = vpop.f32.mrb[0].mxu0
        %v899 = vadd.f32 0.0, %v898
        %900 = vdwg.mxu0
        %901 = vmatprep.subr.bf16.mxu0 0
        %902 = vmatpush1.bf16.msra.mxu0 %v856
        %903 = vmatprep.subr.bf16.mxu0 0
        %904 = vmatpush1.bf16.msra.mxu0 0
        %905 = vmatprep.subr.bf16.mxu0 0
        %906 = vmatpush1.bf16.msra.mxu0 0
        %907 = vmatprep.subr.bf16.mxu0 0
        %908 = vmatpush1.bf16.msra.mxu0 0
        %909 = vmatprep.subr.bf16.mxu0 0
        %910 = vmatpush1.bf16.msra.mxu0 0
        %911 = vmatprep.subr.bf16.mxu0 0
        %912 = vmatpush1.bf16.msra.mxu0 0
        %913 = vmatprep.subr.bf16.mxu0 0
        %914 = vmatpush1.bf16.msra.mxu0 0
        %915 = vmatprep.subr.bf16.mxu0 0
        %916 = vmatpush1.bf16.msra.mxu0 0
        %917 = vmatprep.subr.bf16.mxu0 0
        %918 = vmatpush1.bf16.msra.mxu0 0
        %919 = vmatprep.subr.bf16.mxu0 0
        %920 = vmatpush1.bf16.msra.mxu0 0
        %921 = vmatprep.subr.bf16.mxu0 0
        %922 = vmatpush1.bf16.msra.mxu0 0
        %923 = vmatprep.subr.bf16.mxu0 0
        %924 = vmatpush1.bf16.msra.mxu0 0
        %925 = vmatprep.subr.bf16.mxu0 0
        %926 = vmatpush1.bf16.msra.mxu0 0
        %927 = vmatprep.subr.bf16.mxu0 0
        %928 = vmatpush1.bf16.msra.mxu0 0
        %929 = vmatprep.subr.bf16.mxu0 0
        %930 = vmatpush1.bf16.msra.mxu0 0
        %931 = vmatprep.subr.bf16.mxu0 0
        %932 = vmatpush1.bf16.msra.mxu0 0
        %933 = vmatprep.mubr.bf16.mxu0 0
        %934 = vmatmul.mubr.bf16.gmra.mrb[0].mxu0 %v847
        %v935 = vpop.f32.mrb[0].mxu0
        %v936 = vadd.f32 0.0, %v935
        %v937 = vpop.f32.mrb[0].mxu0
        %v938 = vpop.f32.mrb[0].mxu0
        %v939 = vadd.f32 0.0, %v938
        %v940 = vpop.f32.mrb[0].mxu0
        %941 = vdwg.mxu0
        %v942 = vadd.f32 %v820, %v893
        %v943 = vadd.f32 %v821, %v895
        %v944 = vadd.f32 %v822, %v936
        %v945 = vadd.f32 %v823, %v897
        %v946 = vadd.f32 %v824, %v899
        %v947 = vadd.f32 %v825, %v939
        %s948 = scalar_lea.vmem %s1, 48
        %v949 = vld [vmem:[%s948] sm:$0xf]
        %v950 = vld [vmem:[%s948 + $0x4] sm:$0xf]
        %v953 = vunpack.c.l.b16 %v949
        %v954 = vunpack.c.l.b16 %v950
        %v955 = vpack.c.b16 %v954, %v953
        %956 = vrot.lane.b32.xlu0 %v237, 92
        %v957 = vpop.permute.xlu0 %956
        %958 = vrot.lane.b32.xlu0 %v238, 92
        %v959 = vpop.permute.xlu0 %958
        %960 = vrot.lane.b32.xlu0 %v239, 92
        %v961 = vpop.permute.xlu0 %960
        %962 = vrot.lane.b32.xlu0 %v240, 92
        %v963 = vpop.permute.xlu0 %962
        %vm964 = vcmask 752640
        %v965 = vsel %vm964, %v957, %v959
        %v966 = vsel %vm964, %v959, %v961
        %v967 = vsel %vm964, %v961, %v963
        %v969 = vsel %vm253, %v955, 0
        %v972 = vsel %vm257, %v965, 0
        %v975 = vsel %vm257, %v966, 0
        %v978 = vsel %vm257, %v967, 0
        %980 = vmatprep.subr.bf16.mxu0 %v975
        %981 = vmatpush1.bf16.msra.mxu0 %v972
        %982 = vmatprep.subr.bf16.mxu0 0
        %983 = vmatpush1.bf16.msra.mxu0 0
        %984 = vmatprep.subr.bf16.mxu0 0
        %985 = vmatpush1.bf16.msra.mxu0 0
        %986 = vmatprep.subr.bf16.mxu0 0
        %987 = vmatpush1.bf16.msra.mxu0 0
        %988 = vmatprep.subr.bf16.mxu0 0
        %989 = vmatpush1.bf16.msra.mxu0 0
        %990 = vmatprep.subr.bf16.mxu0 0
        %991 = vmatpush1.bf16.msra.mxu0 0
        %992 = vmatprep.subr.bf16.mxu0 0
        %993 = vmatpush1.bf16.msra.mxu0 0
        %994 = vmatprep.subr.bf16.mxu0 0
        %995 = vmatpush1.bf16.msra.mxu0 0
        %996 = vmatprep.subr.bf16.mxu0 0
        %997 = vmatpush1.bf16.msra.mxu0 0
        %998 = vmatprep.subr.bf16.mxu0 0
        %999 = vmatpush1.bf16.msra.mxu0 0
        %1000 = vmatprep.subr.bf16.mxu0 0
        %1001 = vmatpush1.bf16.msra.mxu0 0
        %1002 = vmatprep.subr.bf16.mxu0 0
        %1003 = vmatpush1.bf16.msra.mxu0 0
        %1004 = vmatprep.subr.bf16.mxu0 0
        %1005 = vmatpush1.bf16.msra.mxu0 0
        %1006 = vmatprep.subr.bf16.mxu0 0
        %1007 = vmatpush1.bf16.msra.mxu0 0
        %1008 = vmatprep.subr.bf16.mxu0 0
        %1009 = vmatpush1.bf16.msra.mxu0 0
        %1010 = vmatprep.subr.bf16.mxu0 0
        %1011 = vmatpush1.bf16.msra.mxu0 0
        %1012 = vmatprep.mubr.bf16.mxu0 0
        %1013 = vmatmul.mubr.bf16.gmra.mrb[0].mxu0 %v969
        %v1014 = vpop.f32.mrb[0].mxu0
        %v1015 = vadd.f32 0.0, %v1014
        %v1016 = vpop.f32.mrb[0].mxu0
        %v1017 = vadd.f32 0.0, %v1016
        %v1018 = vpop.f32.mrb[0].mxu0
        %v1019 = vadd.f32 0.0, %v1018
        %v1020 = vpop.f32.mrb[0].mxu0
        %v1021 = vadd.f32 0.0, %v1020
        %1022 = vdwg.mxu0
        %1023 = vmatprep.subr.bf16.mxu0 0
        %1024 = vmatpush1.bf16.msra.mxu0 %v978
        %1025 = vmatprep.subr.bf16.mxu0 0
        %1026 = vmatpush1.bf16.msra.mxu0 0
        %1027 = vmatprep.subr.bf16.mxu0 0
        %1028 = vmatpush1.bf16.msra.mxu0 0
        %1029 = vmatprep.subr.bf16.mxu0 0
        %1030 = vmatpush1.bf16.msra.mxu0 0
        %1031 = vmatprep.subr.bf16.mxu0 0
        %1032 = vmatpush1.bf16.msra.mxu0 0
        %1033 = vmatprep.subr.bf16.mxu0 0
        %1034 = vmatpush1.bf16.msra.mxu0 0
        %1035 = vmatprep.subr.bf16.mxu0 0
        %1036 = vmatpush1.bf16.msra.mxu0 0
        %1037 = vmatprep.subr.bf16.mxu0 0
        %1038 = vmatpush1.bf16.msra.mxu0 0
        %1039 = vmatprep.subr.bf16.mxu0 0
        %1040 = vmatpush1.bf16.msra.mxu0 0
        %1041 = vmatprep.subr.bf16.mxu0 0
        %1042 = vmatpush1.bf16.msra.mxu0 0
        %1043 = vmatprep.subr.bf16.mxu0 0
        %1044 = vmatpush1.bf16.msra.mxu0 0
        %1045 = vmatprep.subr.bf16.mxu0 0
        %1046 = vmatpush1.bf16.msra.mxu0 0
        %1047 = vmatprep.subr.bf16.mxu0 0
        %1048 = vmatpush1.bf16.msra.mxu0 0
        %1049 = vmatprep.subr.bf16.mxu0 0
        %1050 = vmatpush1.bf16.msra.mxu0 0
        %1051 = vmatprep.subr.bf16.mxu0 0
        %1052 = vmatpush1.bf16.msra.mxu0 0
        %1053 = vmatprep.subr.bf16.mxu0 0
        %1054 = vmatpush1.bf16.msra.mxu0 0
        %1055 = vmatprep.mubr.bf16.mxu0 0
        %1056 = vmatmul.mubr.bf16.gmra.mrb[0].mxu0 %v969
        %v1057 = vpop.f32.mrb[0].mxu0
        %v1058 = vadd.f32 0.0, %v1057
        %v1059 = vpop.f32.mrb[0].mxu0
        %v1060 = vpop.f32.mrb[0].mxu0
        %v1061 = vadd.f32 0.0, %v1060
        %v1062 = vpop.f32.mrb[0].mxu0
        %1063 = vdwg.mxu0
        %v1064 = vadd.f32 %v942, %v1015
        %v1065 = vadd.f32 %v943, %v1017
        %v1066 = vadd.f32 %v944, %v1058
        %v1067 = vadd.f32 %v945, %v1019
        %v1068 = vadd.f32 %v946, %v1021
        %v1069 = vadd.f32 %v947, %v1061
        %s1070 = scalar_lea.vmem %s1, 56
        %v1071 = vld [vmem:[%s1070] sm:$0xf]
        %v1072 = vld [vmem:[%s1070 + $0x4] sm:$0xf]
        %v1075 = vunpack.c.l.b16 %v1071
        %v1076 = vunpack.c.l.b16 %v1072
        %v1077 = vpack.c.b16 %v1076, %v1075
        %1078 = vrot.lane.b32.xlu0 %v237, 91
        %v1079 = vpop.permute.xlu0 %1078
        %1080 = vrot.lane.b32.xlu0 %v238, 91
        %v1081 = vpop.permute.xlu0 %1080
        %1082 = vrot.lane.b32.xlu0 %v239, 91
        %v1083 = vpop.permute.xlu0 %1082
        %1084 = vrot.lane.b32.xlu0 %v240, 91
        %v1085 = vpop.permute.xlu0 %1084
        %vm1086 = vcmask 744448
        %v1087 = vsel %vm1086, %v1079, %v1081
        %v1088 = vsel %vm1086, %v1081, %v1083
        %v1089 = vsel %vm1086, %v1083, %v1085
        %v1091 = vsel %vm253, %v1077, 0
        %v1094 = vsel %vm257, %v1087, 0
        %v1097 = vsel %vm257, %v1088, 0
        %v1100 = vsel %vm257, %v1089, 0
        %1102 = vmatprep.subr.bf16.mxu0 %v1097
        %1103 = vmatpush1.bf16.msra.mxu0 %v1094
        %1104 = vmatprep.subr.bf16.mxu0 0
        %1105 = vmatpush1.bf16.msra.mxu0 0
        %1106 = vmatprep.subr.bf16.mxu0 0
        %1107 = vmatpush1.bf16.msra.mxu0 0
        %1108 = vmatprep.subr.bf16.mxu0 0
        %1109 = vmatpush1.bf16.msra.mxu0 0
        %1110 = vmatprep.subr.bf16.mxu0 0
        %1111 = vmatpush1.bf16.msra.mxu0 0
        %1112 = vmatprep.subr.bf16.mxu0 0
        %1113 = vmatpush1.bf16.msra.mxu0 0
        %1114 = vmatprep.subr.bf16.mxu0 0
        %1115 = vmatpush1.bf16.msra.mxu0 0
        %1116 = vmatprep.subr.bf16.mxu0 0
        %1117 = vmatpush1.bf16.msra.mxu0 0
        %1118 = vmatprep.subr.bf16.mxu0 0
        %1119 = vmatpush1.bf16.msra.mxu0 0
        %1120 = vmatprep.subr.bf16.mxu0 0
        %1121 = vmatpush1.bf16.msra.mxu0 0
        %1122 = vmatprep.subr.bf16.mxu0 0
        %1123 = vmatpush1.bf16.msra.mxu0 0
        %1124 = vmatprep.subr.bf16.mxu0 0
        %1125 = vmatpush1.bf16.msra.mxu0 0
        %1126 = vmatprep.subr.bf16.mxu0 0
        %1127 = vmatpush1.bf16.msra.mxu0 0
        %1128 = vmatprep.subr.bf16.mxu0 0
        %1129 = vmatpush1.bf16.msra.mxu0 0
        %1130 = vmatprep.subr.bf16.mxu0 0
        %1131 = vmatpush1.bf16.msra.mxu0 0
        %1132 = vmatprep.subr.bf16.mxu0 0
        %1133 = vmatpush1.bf16.msra.mxu0 0
        %1134 = vmatprep.mubr.bf16.mxu0 0
        %1135 = vmatmul.mubr.bf16.gmra.mrb[0].mxu0 %v1091
        %v1136 = vpop.f32.mrb[0].mxu0
        %v1137 = vadd.f32 0.0, %v1136
        %v1138 = vpop.f32.mrb[0].mxu0
        %v1139 = vadd.f32 0.0, %v1138
        %v1140 = vpop.f32.mrb[0].mxu0
        %v1141 = vadd.f32 0.0, %v1140
        %v1142 = vpop.f32.mrb[0].mxu0
        %v1143 = vadd.f32 0.0, %v1142
        %1144 = vdwg.mxu0
        %1145 = vmatprep.subr.bf16.mxu0 0
        %1146 = vmatpush1.bf16.msra.mxu0 %v1100
        %1147 = vmatprep.subr.bf16.mxu0 0
        %1148 = vmatpush1.bf16.msra.mxu0 0
        %1149 = vmatprep.subr.bf16.mxu0 0
        %1150 = vmatpush1.bf16.msra.mxu0 0
        %1151 = vmatprep.subr.bf16.mxu0 0
        %1152 = vmatpush1.bf16.msra.mxu0 0
        %1153 = vmatprep.subr.bf16.mxu0 0
        %1154 = vmatpush1.bf16.msra.mxu0 0
        %1155 = vmatprep.subr.bf16.mxu0 0
        %1156 = vmatpush1.bf16.msra.mxu0 0
        %1157 = vmatprep.subr.bf16.mxu0 0
        %1158 = vmatpush1.bf16.msra.mxu0 0
        %1159 = vmatprep.subr.bf16.mxu0 0
        %1160 = vmatpush1.bf16.msra.mxu0 0
        %1161 = vmatprep.subr.bf16.mxu0 0
        %1162 = vmatpush1.bf16.msra.mxu0 0
        %1163 = vmatprep.subr.bf16.mxu0 0
        %1164 = vmatpush1.bf16.msra.mxu0 0
        %1165 = vmatprep.subr.bf16.mxu0 0
        %1166 = vmatpush1.bf16.msra.mxu0 0
        %1167 = vmatprep.subr.bf16.mxu0 0
        %1168 = vmatpush1.bf16.msra.mxu0 0
        %1169 = vmatprep.subr.bf16.mxu0 0
        %1170 = vmatpush1.bf16.msra.mxu0 0
        %1171 = vmatprep.subr.bf16.mxu0 0
        %1172 = vmatpush1.bf16.msra.mxu0 0
        %1173 = vmatprep.subr.bf16.mxu0 0
        %1174 = vmatpush1.bf16.msra.mxu0 0
        %1175 = vmatprep.subr.bf16.mxu0 0
        %1176 = vmatpush1.bf16.msra.mxu0 0
        %1177 = vmatprep.mubr.bf16.mxu0 0
        %1178 = vmatmul.mubr.bf16.gmra.mrb[0].mxu0 %v1091
        %v1179 = vpop.f32.mrb[0].mxu0
        %v1180 = vadd.f32 0.0, %v1179
        %v1181 = vpop.f32.mrb[0].mxu0
        %v1182 = vpop.f32.mrb[0].mxu0
        %v1183 = vadd.f32 0.0, %v1182
        %v1184 = vpop.f32.mrb[0].mxu0
        %1185 = vdwg.mxu0
        %v1186 = vadd.f32 %v1064, %v1137
        %v1187 = vadd.f32 %v1065, %v1139
        %v1188 = vadd.f32 %v1066, %v1180
        %v1189 = vadd.f32 %v1067, %v1141
        %v1190 = vadd.f32 %v1068, %v1143
        %v1191 = vadd.f32 %v1069, %v1183
        %s1192 = scalar_lea.vmem %s1, 64
        %v1193 = vld [vmem:[%s1192] sm:$0xf]
        %v1194 = vld [vmem:[%s1192 + $0x4] sm:$0xf]
        %v1197 = vunpack.c.l.b16 %v1193
        %v1198 = vunpack.c.l.b16 %v1194
        %v1199 = vpack.c.b16 %v1198, %v1197
        %1200 = vrot.lane.b32.xlu0 %v237, 90
        %v1201 = vpop.permute.xlu0 %1200
        %1202 = vrot.lane.b32.xlu0 %v238, 90
        %v1203 = vpop.permute.xlu0 %1202
        %1204 = vrot.lane.b32.xlu0 %v239, 90
        %v1205 = vpop.permute.xlu0 %1204
        %1206 = vrot.lane.b32.xlu0 %v240, 90
        %v1207 = vpop.permute.xlu0 %1206
        %vm1208 = vcmask 736256
        %v1209 = vsel %vm1208, %v1201, %v1203
        %v1210 = vsel %vm1208, %v1203, %v1205
        %v1211 = vsel %vm1208, %v1205, %v1207
        %v1213 = vsel %vm253, %v1199, 0
        %v1216 = vsel %vm257, %v1209, 0
        %v1219 = vsel %vm257, %v1210, 0
        %v1222 = vsel %vm257, %v1211, 0
        %1224 = vmatprep.subr.bf16.mxu0 %v1219
        %1225 = vmatpush1.bf16.msra.mxu0 %v1216
        %1226 = vmatprep.subr.bf16.mxu0 0
        %1227 = vmatpush1.bf16.msra.mxu0 0
        %1228 = vmatprep.subr.bf16.mxu0 0
        %1229 = vmatpush1.bf16.msra.mxu0 0
        %1230 = vmatprep.subr.bf16.mxu0 0
        %1231 = vmatpush1.bf16.msra.mxu0 0
        %1232 = vmatprep.subr.bf16.mxu0 0
        %1233 = vmatpush1.bf16.msra.mxu0 0
        %1234 = vmatprep.subr.bf16.mxu0 0
        %1235 = vmatpush1.bf16.msra.mxu0 0
        %1236 = vmatprep.subr.bf16.mxu0 0
        %1237 = vmatpush1.bf16.msra.mxu0 0
        %1238 = vmatprep.subr.bf16.mxu0 0
        %1239 = vmatpush1.bf16.msra.mxu0 0
        %1240 = vmatprep.subr.bf16.mxu0 0
        %1241 = vmatpush1.bf16.msra.mxu0 0
        %1242 = vmatprep.subr.bf16.mxu0 0
        %1243 = vmatpush1.bf16.msra.mxu0 0
        %1244 = vmatprep.subr.bf16.mxu0 0
        %1245 = vmatpush1.bf16.msra.mxu0 0
        %1246 = vmatprep.subr.bf16.mxu0 0
        %1247 = vmatpush1.bf16.msra.mxu0 0
        %1248 = vmatprep.subr.bf16.mxu0 0
        %1249 = vmatpush1.bf16.msra.mxu0 0
        %1250 = vmatprep.subr.bf16.mxu0 0
        %1251 = vmatpush1.bf16.msra.mxu0 0
        %1252 = vmatprep.subr.bf16.mxu0 0
        %1253 = vmatpush1.bf16.msra.mxu0 0
        %1254 = vmatprep.subr.bf16.mxu0 0
        %1255 = vmatpush1.bf16.msra.mxu0 0
        %1256 = vmatprep.mubr.bf16.mxu0 0
        %1257 = vmatmul.mubr.bf16.gmra.mrb[0].mxu0 %v1213
        %v1258 = vpop.f32.mrb[0].mxu0
        %v1259 = vadd.f32 0.0, %v1258
        %v1260 = vpop.f32.mrb[0].mxu0
        %v1261 = vadd.f32 0.0, %v1260
        %v1262 = vpop.f32.mrb[0].mxu0
        %v1263 = vadd.f32 0.0, %v1262
        %v1264 = vpop.f32.mrb[0].mxu0
        %v1265 = vadd.f32 0.0, %v1264
        %1266 = vdwg.mxu0
        %1267 = vmatprep.subr.bf16.mxu0 0
        %1268 = vmatpush1.bf16.msra.mxu0 %v1222
        %1269 = vmatprep.subr.bf16.mxu0 0
        %1270 = vmatpush1.bf16.msra.mxu0 0
        %1271 = vmatprep.subr.bf16.mxu0 0
        %1272 = vmatpush1.bf16.msra.mxu0 0
        %1273 = vmatprep.subr.bf16.mxu0 0
        %1274 = vmatpush1.bf16.msra.mxu0 0
        %1275 = vmatprep.subr.bf16.mxu0 0
        %1276 = vmatpush1.bf16.msra.mxu0 0
        %1277 = vmatprep.subr.bf16.mxu0 0
        %1278 = vmatpush1.bf16.msra.mxu0 0
        %1279 = vmatprep.subr.bf16.mxu0 0
        %1280 = vmatpush1.bf16.msra.mxu0 0
        %1281 = vmatprep.subr.bf16.mxu0 0
        %1282 = vmatpush1.bf16.msra.mxu0 0
        %1283 = vmatprep.subr.bf16.mxu0 0
        %1284 = vmatpush1.bf16.msra.mxu0 0
        %1285 = vmatprep.subr.bf16.mxu0 0
        %1286 = vmatpush1.bf16.msra.mxu0 0
        %1287 = vmatprep.subr.bf16.mxu0 0
        %1288 = vmatpush1.bf16.msra.mxu0 0
        %1289 = vmatprep.subr.bf16.mxu0 0
        %1290 = vmatpush1.bf16.msra.mxu0 0
        %1291 = vmatprep.subr.bf16.mxu0 0
        %1292 = vmatpush1.bf16.msra.mxu0 0
        %1293 = vmatprep.subr.bf16.mxu0 0
        %1294 = vmatpush1.bf16.msra.mxu0 0
        %1295 = vmatprep.subr.bf16.mxu0 0
        %1296 = vmatpush1.bf16.msra.mxu0 0
        %1297 = vmatprep.subr.bf16.mxu0 0
        %1298 = vmatpush1.bf16.msra.mxu0 0
        %1299 = vmatprep.mubr.bf16.mxu0 0
        %1300 = vmatmul.mubr.bf16.gmra.mrb[0].mxu0 %v1213
        %v1301 = vpop.f32.mrb[0].mxu0
        %v1302 = vadd.f32 0.0, %v1301
        %v1303 = vpop.f32.mrb[0].mxu0
        %v1304 = vpop.f32.mrb[0].mxu0
        %v1305 = vadd.f32 0.0, %v1304
        %v1306 = vpop.f32.mrb[0].mxu0
        %1307 = vdwg.mxu0
        %v1308 = vadd.f32 %v1186, %v1259
        %v1309 = vadd.f32 %v1187, %v1261
        %v1310 = vadd.f32 %v1188, %v1302
        %v1311 = vadd.f32 %v1189, %v1263
        %v1312 = vadd.f32 %v1190, %v1265
        %v1313 = vadd.f32 %v1191, %v1305
        %v1314 = vld [vmem:[%s2] sm:$0xff]
        %v1315 = vld [vmem:[%s2 + $0x8] sm:$0xff]
        %1317 = vset.pattern.permute.xlu0 0
        %1318 = vperm.xlu0 %1317, %v1314
        %v1319 = vpop.permute.xlu0 %1318
        %1322 = vset.pattern.permute.xlu0 0
        %1323 = vperm.xlu0 %1322, %v1315
        %v1324 = vpop.permute.xlu0 %1323
        %v1326 = vadd.f32 %v1308, %v1319
        %v1327 = vadd.f32 %v1309, %v1319
        %v1328 = vadd.f32 %v1310, %v1319
        %v1329 = vadd.f32 %v1311, %v1324
        %v1330 = vadd.f32 %v1312, %v1324
        %v1331 = vadd.f32 %v1313, %v1324
        %1332 = vst [vmem:[%s153] sm:$0xff] %v1326
        %1333 = vst [vmem:[%s153 + $0x8] sm:$0xff] %v1327
        %1334 = vst [vmem:[%s153 + $0x10] sm:$0xff] %v1328
        %v1335 = vmax.f32 %v1329, 0.0
        %v1336 = vmax.f32 %v1330, 0.0
        %v1337 = vmax.f32 %v1331, 0.0
        %v1338 = vand.u32 2147483647, %v1329
        %v1339 = vand.u32 2147483647, %v1330
        %v1340 = vand.u32 2147483647, %v1331
        %v1341 = vsub.f32 0.0, %v1338
        %v1342 = vsub.f32 0.0, %v1339
        %v1343 = vsub.f32 0.0, %v1340
        %v1344 = vmul.f32 %v1341, 1.442695
        %v1345 = vpow.pop %v1344
        %v1346 = vmul.f32 %v1342, 1.442695
        %v1347 = vpow.pop %v1346
        %v1348 = vmul.f32 %v1343, 1.442695
        %v1349 = vpow.pop %v1348
        %v1350 = vadd.f32 %v1345, 1.0
        %v1351 = vlog2.pop %v1350
        %v1352 = vmul.f32 %v1351, 0.6931472
        %v1353 = vmul.f32 -0.5, %v1345
        %v1354 = vadd.f32 %v1353, 1.0
        %v1355 = vmul.f32 %v1354, %v1345
        %v1356 = vand.u32 2147483647, %v1345
        %vm1357 = vcmp.lt.f32.partialorder %v1356, 0.0004427343
        %v1358 = vsel %vm1357, %v1355, %v1352
        %v1359 = vadd.f32 %v1347, 1.0
        %v1360 = vlog2.pop %v1359
        %v1361 = vmul.f32 %v1360, 0.6931472
        %v1362 = vmul.f32 -0.5, %v1347
        %v1363 = vadd.f32 %v1362, 1.0
        %v1364 = vmul.f32 %v1363, %v1347
        %v1365 = vand.u32 2147483647, %v1347
        %vm1366 = vcmp.lt.f32.partialorder %v1365, 0.0004427343
        %v1367 = vsel %vm1366, %v1364, %v1361
        %v1368 = vadd.f32 %v1349, 1.0
        %v1369 = vlog2.pop %v1368
        %v1370 = vmul.f32 %v1369, 0.6931472
        %v1371 = vmul.f32 -0.5, %v1349
        %v1372 = vadd.f32 %v1371, 1.0
        %v1373 = vmul.f32 %v1372, %v1349
        %v1374 = vand.u32 2147483647, %v1349
        %vm1375 = vcmp.lt.f32.partialorder %v1374, 0.0004427343
        %v1376 = vsel %vm1375, %v1373, %v1370
        %v1377 = vadd.f32 %v1335, %v1358
        %v1378 = vadd.f32 %v1336, %v1367
        %v1379 = vadd.f32 %v1337, %v1376
        %1380 = vst [vmem:[%s160] sm:$0xff] %v1377
        %1381 = vst [vmem:[%s160 + $0x8] sm:$0xff] %v1378
        %1382 = vst [vmem:[%s160 + $0x10] sm:$0xff] %v1379
        %s1383 = sand.u32 %s72, 1
        %s1384 = scalar_lea.sflag [#allocation5], %s1383
        %s1385 = sand.u32 %s72, 1
        %s1386 = smul.addr %s1385, 24
        %s1387 = scalar_lea.vmem [#allocation4], %s1386
        %s1388 = sand.u32 %s98, 1
        %s1389 = scalar_lea.sflag [#allocation7], %s1388
        %s1390 = sand.u32 %s98, 1
        %s1391 = smul.addr %s1390, 24
        %s1392 = scalar_lea.vmem [#allocation6], %s1391
        // Predicated region
        $region63: #{tpu_custom_call.1} parent=27 // pred_check
          %p1393 = pneg %p82
        $region64: #{tpu_custom_call.1} parent=27 // pred_check_branch
          %1395 = sbr.rel (%p1393) target = $region66
        $region65: #{tpu_custom_call.1} parent=27 // pred_region
          %s1396 = smul.u32 3, %s22
          %s1398 = ssub.s32 384, 384
          %1399 = vsyncadd %s1384, %s1398
          %s1400 = smul.addr %s1396, 128
          %s1401 = scalar_lea.hbm %s3, %s1400
          %s1403 = sshll.u32 %s1387, 4
          %s1404 = int_to_ptr.vmem [resolvable:$true] %s1403
          %1406 = dma.vmem_to_hbm [thread:$0]  %s1404, 384, %s1401, %s1384
        $region66: #{tpu_custom_call.1} parent=27 // pred_fallthru
          _
        // Predicated region
        $region67: #{tpu_custom_call.1} parent=27 // pred_check
          %p1407 = pneg %p108
        $region68: #{tpu_custom_call.1} parent=27 // pred_check_branch
          %1409 = sbr.rel (%p1407) target = $region70
        $region69: #{tpu_custom_call.1} parent=27 // pred_region
          %s1410 = smul.u32 3, %s22
          %s1412 = ssub.s32 384, 384
          %1413 = vsyncadd %s1389, %s1412
          %s1414 = smul.addr %s1410, 128
          %s1415 = scalar_lea.hbm %s4, %s1414
          %s1417 = sshll.u32 %s1392, 4
          %s1418 = int_to_ptr.vmem [resolvable:$true] %s1417
          %1420 = dma.vmem_to_hbm [thread:$0]  %s1418, 384, %s1415, %s1389
        $region70: #{tpu_custom_call.1} parent=27 // pred_fallthru
          _
      $region28: #{tpu_custom_call.1} parent=5 // pred_fallthru
        _
      %p1421 = scmp.le.s32.totalorder 2, %s17
      // Predicated region
      $region71: #{tpu_custom_call.1} parent=5 // pred_check
        %p1422 = pneg %p1421
      $region72: #{tpu_custom_call.1} parent=5 // pred_check_branch
        %1424 = sbr.rel (%p1422) target = $region74
      $region73: #{tpu_custom_call.1} parent=5 // pred_region
        %s1425 = ssub.s32 %s17, 2
        // Predicated region
        $region75: #{tpu_custom_call.1} parent=73 // pred_check
          %p1426 = pneg %p88
        $region76: #{tpu_custom_call.1} parent=73 // pred_check_branch
          %1428 = sbr.rel (%p1426) target = $region78
        $region77: #{tpu_custom_call.1} parent=73 // pred_region
          %s1429 = sand.u32 %s73, 1
          %s1430 = scalar_lea.sflag [#allocation5], %s1429
          %s1431 = sand.u32 %s73, 1
          %s1432 = smul.addr %s1431, 24
          %s1433 = scalar_lea.vmem [#allocation4], %s1432
          %1434 = dma.done %s1430, 384
        $region78: #{tpu_custom_call.1} parent=73 // pred_fallthru
          _
        // Predicated region
        $region79: #{tpu_custom_call.1} parent=73 // pred_check
          %p1435 = pneg %p114
        $region80: #{tpu_custom_call.1} parent=73 // pred_check_branch
          %1437 = sbr.rel (%p1435) target = $region82
        $region81: #{tpu_custom_call.1} parent=73 // pred_region
          %s1438 = sand.u32 %s99, 1
          %s1439 = scalar_lea.sflag [#allocation7], %s1438
          %s1440 = sand.u32 %s99, 1
          %s1441 = smul.addr %s1440, 24
          %s1442 = scalar_lea.vmem [#allocation6], %s1441
          %1443 = dma.done %s1439, 384
        $region82: #{tpu_custom_call.1} parent=73 // pred_fallthru
          _
      $region74: #{tpu_custom_call.1} parent=5 // pred_fallthru
        _
    $region6: #{tpu_custom_call.1} parent=1 // loop_footer
      %s21 = sadd.s32 1, %s17
    $region7: #{tpu_custom_call.1} parent=1 // loop_footer_branch
      %16 = sbr.rel target = $region3
    $region8: #{tpu_custom_call.1} parent=1 // loop_exit
      _
    %1444 = vsyncpa [#allocation5], 1
    %s1445 = scalar_lea.sflag [#allocation5], 1
    %1446 = vsyncpa %s1445, 1
    %1447 = vsyncpa [#allocation7], 1
    %s1448 = scalar_lea.sflag [#allocation7], 1
    %1449 = vsyncpa %s1448, 1
  %1450 = vsyncmov [#allocation3]
  %s1451 = vpop.sfrf %1450
  %p1452 = scmp.eq.s32.totalorder %s1451, 0
  %p1453 = pneg %p1452
  %1455 = shalt.err (%p1453)

</llo_original>
